<compile_context>
chip_gen: v5e
topology: v5e:2x2
jax: 0.10.0
libtpu: 0.0.40
codegen_flags: <defaults>
</compile_context>

<pallas_src>
import functools

import jax
import jax.numpy as jnp
from jax import lax
from jax.experimental import pallas as pl
from jax.experimental.pallas import tpu as pltpu

_TWO_PI = 6.283185307179586
_INV_2_24 = 1.0 / float(1 << 24)
# ~2 MiB per block: with double-buffered input + output this stays well inside every
# generation's scoped-VMEM default (v5e 16 MiB, v6e 32 MiB, v7x 32 MiB).
_TARGET_BLOCK_BYTES = 2 * 1024 * 1024


def _i32(v):
    """Python int -> int32 constant with two's-complement wraparound."""
    v &= 0xFFFFFFFF
    if v >= 0x80000000:
        v -= 1 << 32
    return jnp.int32(v)


def _lshr(x, n):
    """Logical right shift for int32 values (arithmetic shift + mask)."""
    return jnp.right_shift(x, n) & _i32((1 << (32 - n)) - 1)


def _hash32(x, key):
    """Keyed avalanche hash (lowbias32-style); int32 wraparound arithmetic only."""
    x = x ^ key
    x = x * _i32(0x7FEB352D)
    x = x ^ _lshr(x, 15)
    x = x * _i32(0x846CA68B)
    x = x ^ _lshr(x, 16)
    x = x * _i32(0x9E3779B1)
    x = x ^ _lshr(x, 16)
    return x


def _bits_to_uniform(bits):
    """Hash bits -> uniform float32 in (0, 1): 24 high-quality bits, open interval."""
    m = _lshr(bits, 8)  # in [0, 2^24)
    return (m.astype(jnp.float32) + jnp.float32(0.5)) * jnp.float32(_INV_2_24)


def _gaussian_noise_kernel(seed_ref, x_ref, o_ref, *, stddev):
    rows_b, width_b = x_ref.shape          # static block shape
    half_w = width_b // 2                  # multiple of 128 (width is >= 256)

    # Seed-derived keys (scalar int32 math) and per-element global counters:
    # a pure function of (seed, block index, position) -> grid can be "parallel".
    seed = seed_ref[0]
    key1 = seed * _i32(0x9E3779B9) + _i32(0x85EBCA6B)
    key2 = seed * _i32(0x9E3779B9) + _i32(0xC2B2AE35)

    base = pl.program_id(0) * jnp.int32(rows_b * half_w)
    row = lax.broadcasted_iota(jnp.int32, (rows_b, half_w), 0)
    col = lax.broadcasted_iota(jnp.int32, (rows_b, half_w), 1)
    ctr = base + row * jnp.int32(half_w) + col

    u1 = _bits_to_uniform(_hash32(ctr, key1))
    u2 = _bits_to_uniform(_hash32(ctr, key2))

    # Box-Muller, using both branches: one (u1, u2) pair -> two normals.
    r = jnp.sqrt(jnp.float32(-2.0) * jnp.log(u1)) * jnp.float32(stddev)
    theta = jnp.float32(_TWO_PI) * u2
    z1 = r * jnp.cos(theta)
    z2 = r * jnp.sin(theta)

    xl = x_ref[:, :half_w].astype(jnp.float32)
    xr = x_ref[:, half_w:].astype(jnp.float32)
    o_ref[:, :half_w] = (xl + z1).astype(o_ref.dtype)
    o_ref[:, half_w:] = (xr + z2).astype(o_ref.dtype)


def gaussian_noise(x, p, seed, training=True):
    """JAX/Pallas equivalent of GaussianNoise(p).forward(x)."""
    if p < 0 or p > 1:
        raise ValueError(
            "dropout probability has to be between 0 and 1, but got {}".format(p))
    if not training or p == 0:
        return x

    orig_shape = x.shape
    flat = x.reshape(-1)
    n = flat.shape[0]

    # Lane-dense 2D slab; prefer a width that divides n so no padding pass is needed.
    width = None
    for w in (1024, 512, 256):
        if n % w == 0:
            width = w
            break
    if width is None:
        width = 256
        padded = pl.cdiv(n, width) * width
        flat = jnp.pad(flat, (0, padded - n))
    else:
        padded = n

    rows = padded // width
    x2d = flat.reshape(rows, width)

    # ~2 MiB blocks (amortize per-grid-step overhead and DMA).
    itemsize = jnp.dtype(x.dtype).itemsize
    target_rows = max(8, _TARGET_BLOCK_BYTES // (width * itemsize))
    if target_rows >= rows:
        block_rows = rows                      # single block == full array dims
    else:
        block_rows = (target_rows // 8) * 8    # (8, 128)-aligned tile rows
    grid = pl.cdiv(rows, block_rows)

    seed_arr = jnp.asarray([seed], dtype=jnp.int32)
    kernel = functools.partial(_gaussian_noise_kernel, stddev=float(p))

    out2d = pl.pallas_call(
        kernel,
        out_shape=jax.ShapeDtypeStruct((rows, width), x.dtype),
        grid=(grid,),
        in_specs=[
            pl.BlockSpec(memory_space=pltpu.MemorySpace.SMEM),     # seed scalar
            pl.BlockSpec((block_rows, width), lambda i: (i, 0)),   # x block
        ],
        out_specs=pl.BlockSpec((block_rows, width), lambda i: (i, 0)),
        compiler_params=pltpu.CompilerParams(
            dimension_semantics=("parallel",),   # blocks independent -> shard on v7x
        ),
    )(seed_arr, x2d)

    if padded != n:
        return out2d.reshape(-1)[:n].reshape(orig_shape)
    return out2d.reshape(orig_shape)


if __name__ == "__main__":
    key = jax.random.PRNGKey(0)
    # small NCHW input consistent with the module's use in a conv net
    x = jax.random.normal(key, (2, 4, 16, 16), dtype=jnp.float32)
    p = 0.2

    # training mode: adds N(0,1)*p noise inside the Pallas kernel
    y_train = jax.block_until_ready(gaussian_noise(x, p, seed=1234, training=True))
    # eval mode: identity passthrough
    y_eval = jax.block_until_ready(gaussian_noise(x, p, seed=1234, training=False))

    assert y_train.shape == x.shape and y_train.dtype == x.dtype
    assert bool(jnp.all(y_eval == x))

    resid = y_train - x
    resid_std = float(jnp.std(resid))
    resid_mean = float(jnp.mean(resid))
    assert 0.05 < resid_std < 0.5, resid_std
    assert abs(resid_mean) < 0.1, resid_mean

    print("KERNEL_OK")
</pallas_src>

<mosaic_0001>
module attributes {stable_mosaic.version = 11 : i64} {
  func.func @_gaussian_noise_kernel(%arg0: i32, %arg1: memref<1xi32, #tpu.memory_space<smem>>, %arg2: memref<2x1024xf32, #tpu.memory_space<vmem>>, %arg3: memref<2x1024xf32, #tpu.memory_space<vmem>>) attributes {dimension_semantics = [#tpu.dimension_semantics<parallel>], iteration_bounds = array<i64: 1>, scalar_prefetch = 0 : i64, scratch_operands = 0 : i64, tpu.core_type = #tpu.core_type<tc>, window_params = [{transform_indices = @transform_0, window_bounds = array<i64: 1>}, {transform_indices = @transform_1, window_bounds = array<i64: 2, 1024>}, {transform_indices = @transform_2, window_bounds = array<i64: 2, 1024>}]} {
    %c0 = arith.constant 0 : index
    %0 = memref.load %arg1[%c0] : memref<1xi32, #tpu.memory_space<smem>>
    %c-1640531527_i32 = arith.constant -1640531527 : i32
    %1 = arith.muli %0, %c-1640531527_i32 : i32
    %c-2048144789_i32 = arith.constant -2048144789 : i32
    %2 = arith.addi %1, %c-2048144789_i32 : i32
    %c-1640531527_i32_0 = arith.constant -1640531527 : i32
    %3 = arith.muli %0, %c-1640531527_i32_0 : i32
    %c-1028477387_i32 = arith.constant -1028477387 : i32
    %4 = arith.addi %3, %c-1028477387_i32 : i32
    %c1024_i32 = arith.constant 1024 : i32
    %5 = arith.muli %arg0, %c1024_i32 : i32
    %6 = tpu.iota {dimensions = array<i32: 0>} : vector<2x512xi32>
    %7 = tpu.iota {dimensions = array<i32: 1>} : vector<2x512xi32>
    %c512_i32 = arith.constant 512 : i32
    %8 = vector.broadcast %c512_i32 : i32 to vector<2x512xi32>
    %9 = arith.muli %6, %8 : vector<2x512xi32>
    %10 = vector.broadcast %5 : i32 to vector<2x512xi32>
    %11 = arith.addi %10, %9 : vector<2x512xi32>
    %12 = arith.addi %11, %7 : vector<2x512xi32>
    %13 = vector.broadcast %2 : i32 to vector<2x512xi32>
    %14 = arith.xori %12, %13 : vector<2x512xi32>
    %c2146121005_i32 = arith.constant 2146121005 : i32
    %15 = vector.broadcast %c2146121005_i32 : i32 to vector<2x512xi32>
    %16 = arith.muli %14, %15 : vector<2x512xi32>
    %c15_i32 = arith.constant 15 : i32
    %17 = vector.broadcast %c15_i32 : i32 to vector<2x512xi32>
    %18 = arith.shrsi %16, %17 : vector<2x512xi32>
    %c131071_i32 = arith.constant 131071 : i32
    %19 = vector.broadcast %c131071_i32 : i32 to vector<2x512xi32>
    %20 = arith.andi %18, %19 : vector<2x512xi32>
    %21 = arith.xori %16, %20 : vector<2x512xi32>
    %c-2073254261_i32 = arith.constant -2073254261 : i32
    %22 = vector.broadcast %c-2073254261_i32 : i32 to vector<2x512xi32>
    %23 = arith.muli %21, %22 : vector<2x512xi32>
    %c16_i32 = arith.constant 16 : i32
    %24 = vector.broadcast %c16_i32 : i32 to vector<2x512xi32>
    %25 = arith.shrsi %23, %24 : vector<2x512xi32>
    %c65535_i32 = arith.constant 65535 : i32
    %26 = vector.broadcast %c65535_i32 : i32 to vector<2x512xi32>
    %27 = arith.andi %25, %26 : vector<2x512xi32>
    %28 = arith.xori %23, %27 : vector<2x512xi32>
    %c-1640531535_i32 = arith.constant -1640531535 : i32
    %29 = vector.broadcast %c-1640531535_i32 : i32 to vector<2x512xi32>
    %30 = arith.muli %28, %29 : vector<2x512xi32>
    %c16_i32_1 = arith.constant 16 : i32
    %31 = vector.broadcast %c16_i32_1 : i32 to vector<2x512xi32>
    %32 = arith.shrsi %30, %31 : vector<2x512xi32>
    %c65535_i32_2 = arith.constant 65535 : i32
    %33 = vector.broadcast %c65535_i32_2 : i32 to vector<2x512xi32>
    %34 = arith.andi %32, %33 : vector<2x512xi32>
    %35 = arith.xori %30, %34 : vector<2x512xi32>
    %c8_i32 = arith.constant 8 : i32
    %36 = vector.broadcast %c8_i32 : i32 to vector<2x512xi32>
    %37 = arith.shrsi %35, %36 : vector<2x512xi32>
    %c16777215_i32 = arith.constant 16777215 : i32
    %38 = vector.broadcast %c16777215_i32 : i32 to vector<2x512xi32>
    %39 = arith.andi %37, %38 : vector<2x512xi32>
    %40 = arith.sitofp %39 : vector<2x512xi32> to vector<2x512xf32>
    %cst = arith.constant 5.000000e-01 : f32
    %41 = vector.broadcast %cst : f32 to vector<2x512xf32>
    %42 = arith.addf %40, %41 : vector<2x512xf32>
    %cst_3 = arith.constant 5.96046448E-8 : f32
    %43 = vector.broadcast %cst_3 : f32 to vector<2x512xf32>
    %44 = arith.mulf %42, %43 : vector<2x512xf32>
    %45 = vector.broadcast %4 : i32 to vector<2x512xi32>
    %46 = arith.xori %12, %45 : vector<2x512xi32>
    %c2146121005_i32_4 = arith.constant 2146121005 : i32
    %47 = vector.broadcast %c2146121005_i32_4 : i32 to vector<2x512xi32>
    %48 = arith.muli %46, %47 : vector<2x512xi32>
    %c15_i32_5 = arith.constant 15 : i32
    %49 = vector.broadcast %c15_i32_5 : i32 to vector<2x512xi32>
    %50 = arith.shrsi %48, %49 : vector<2x512xi32>
    %c131071_i32_6 = arith.constant 131071 : i32
    %51 = vector.broadcast %c131071_i32_6 : i32 to vector<2x512xi32>
    %52 = arith.andi %50, %51 : vector<2x512xi32>
    %53 = arith.xori %48, %52 : vector<2x512xi32>
    %c-2073254261_i32_7 = arith.constant -2073254261 : i32
    %54 = vector.broadcast %c-2073254261_i32_7 : i32 to vector<2x512xi32>
    %55 = arith.muli %53, %54 : vector<2x512xi32>
    %c16_i32_8 = arith.constant 16 : i32
    %56 = vector.broadcast %c16_i32_8 : i32 to vector<2x512xi32>
    %57 = arith.shrsi %55, %56 : vector<2x512xi32>
    %c65535_i32_9 = arith.constant 65535 : i32
    %58 = vector.broadcast %c65535_i32_9 : i32 to vector<2x512xi32>
    %59 = arith.andi %57, %58 : vector<2x512xi32>
    %60 = arith.xori %55, %59 : vector<2x512xi32>
    %c-1640531535_i32_10 = arith.constant -1640531535 : i32
    %61 = vector.broadcast %c-1640531535_i32_10 : i32 to vector<2x512xi32>
    %62 = arith.muli %60, %61 : vector<2x512xi32>
    %c16_i32_11 = arith.constant 16 : i32
    %63 = vector.broadcast %c16_i32_11 : i32 to vector<2x512xi32>
    %64 = arith.shrsi %62, %63 : vector<2x512xi32>
    %c65535_i32_12 = arith.constant 65535 : i32
    %65 = vector.broadcast %c65535_i32_12 : i32 to vector<2x512xi32>
    %66 = arith.andi %64, %65 : vector<2x512xi32>
    %67 = arith.xori %62, %66 : vector<2x512xi32>
    %c8_i32_13 = arith.constant 8 : i32
    %68 = vector.broadcast %c8_i32_13 : i32 to vector<2x512xi32>
    %69 = arith.shrsi %67, %68 : vector<2x512xi32>
    %c16777215_i32_14 = arith.constant 16777215 : i32
    %70 = vector.broadcast %c16777215_i32_14 : i32 to vector<2x512xi32>
    %71 = arith.andi %69, %70 : vector<2x512xi32>
    %72 = arith.sitofp %71 : vector<2x512xi32> to vector<2x512xf32>
    %cst_15 = arith.constant 5.000000e-01 : f32
    %73 = vector.broadcast %cst_15 : f32 to vector<2x512xf32>
    %74 = arith.addf %72, %73 : vector<2x512xf32>
    %cst_16 = arith.constant 5.96046448E-8 : f32
    %75 = vector.broadcast %cst_16 : f32 to vector<2x512xf32>
    %76 = arith.mulf %74, %75 : vector<2x512xf32>
    %77 = math.log %44 : vector<2x512xf32>
    %cst_17 = arith.constant -2.000000e+00 : f32
    %78 = vector.broadcast %cst_17 : f32 to vector<2x512xf32>
    %79 = arith.mulf %78, %77 : vector<2x512xf32>
    %80 = math.sqrt %79 : vector<2x512xf32>
    %cst_18 = arith.constant 2.000000e-01 : f32
    %81 = vector.broadcast %cst_18 : f32 to vector<2x512xf32>
    %82 = arith.mulf %80, %81 : vector<2x512xf32>
    %cst_19 = arith.constant 6.28318548 : f32
    %83 = vector.broadcast %cst_19 : f32 to vector<2x512xf32>
    %84 = arith.mulf %83, %76 : vector<2x512xf32>
    %85 = math.cos %84 : vector<2x512xf32>
    %86 = arith.mulf %82, %85 : vector<2x512xf32>
    %87 = math.sin %84 : vector<2x512xf32>
    %88 = arith.mulf %82, %87 : vector<2x512xf32>
    %c0_20 = arith.constant 0 : index
    %c0_21 = arith.constant 0 : index
    %89 = vector.load %arg2[%c0_20, %c0_21] : memref<2x1024xf32, #tpu.memory_space<vmem>>, vector<2x512xf32>
    %c0_22 = arith.constant 0 : index
    %c512 = arith.constant 512 : index
    %90 = vector.load %arg2[%c0_22, %c512] : memref<2x1024xf32, #tpu.memory_space<vmem>>, vector<2x512xf32>
    %91 = arith.addf %89, %86 : vector<2x512xf32>
    %c0_23 = arith.constant 0 : index
    %c0_24 = arith.constant 0 : index
    %92 = vector.load %arg3[%c0_23, %c0_24] : memref<2x1024xf32, #tpu.memory_space<vmem>>, vector<2x512xf32>
    tpu.vector_store %arg3[%c0_23, %c0_24], %91 {strides = array<i32>} : memref<2x1024xf32, #tpu.memory_space<vmem>>, vector<2x512xf32>,
    %93 = arith.addf %90, %88 : vector<2x512xf32>
    %c0_25 = arith.constant 0 : index
    %c512_26 = arith.constant 512 : index
    %94 = vector.load %arg3[%c0_25, %c512_26] : memref<2x1024xf32, #tpu.memory_space<vmem>>, vector<2x512xf32>
    tpu.vector_store %arg3[%c0_25, %c512_26], %93 {strides = array<i32>} : memref<2x1024xf32, #tpu.memory_space<vmem>>, vector<2x512xf32>,
    return
  }
  func.func @transform_0(%arg0: i32) -> i32 {
    %c0_i32 = arith.constant 0 : i32
    %c0_i32_0 = arith.constant 0 : i32
    return %c0_i32 : i32
  }
  func.func @transform_1(%arg0: i32) -> (i32, i32) {
    %c0_i32 = arith.constant 0 : i32
    %c0_i32_0 = arith.constant 0 : i32
    return %arg0, %c0_i32 : i32, i32
  }
  func.func @transform_2(%arg0: i32) -> (i32, i32) {
    %c0_i32 = arith.constant 0 : i32
    %c0_i32_0 = arith.constant 0 : i32
    return %arg0, %c0_i32 : i32, i32
  }
}

</mosaic_0001>

<llo_original>
// kernel: tpu_custom_call.1
$region0: #{tpu_custom_call.1}
  #allocation0 [shape = 'u32[]', space=smem, size = 0x4, offset = 0x4, fixed_abs, tag = 'smem constant byte address 0x4 - core index']
  #allocation1 [shape = 'u32[72,128]{1,0:T(1,128)}', space=vmem, size = 0x9000, scoped, tag = 'internal scratch']
  #allocation2 [shape = 's32[1]{0:T(128)S(6)}', space=smem, size = 0x200, scoped, tag = 'scoped memory for tpu_custom_call.1']
  %s0 = inlined_call_operand.<no memory space> [shape: s32[1], index: 0, kind: input, shape index: {}]
  %s1 = inlined_call_operand.hbm [shape: f32[2,1024], index: 1, kind: input, shape index: {}]
  %s2 = inlined_call_operand.hbm [shape: f32[2,1024], index: 2, kind: output, shape index: {}]
  %s3 = sld [smem:[#allocation0]]
  $region22: #{tpu_custom_call.1} parent=0
    _
  %s5 = ssub.s32 1, %s3
  %s6 = scalar_select 0, %s5, %s3
  %7 = sst [smem:[#allocation2]] %s0
  $region1: #{tpu_custom_call.1} parent=0
    #allocation3 [shape = 'u8[8192]{0}', space=vmem, size = 0x2000, scoped, tag = 'input window, operand 1, single buffered']
    #allocation4 [shape = 's32[1]{0}', space=sflag, size = 0x4, scoped, tag = 'scoped memory for tpu_custom_call.1']
    #allocation5 [shape = 's32[1]{0}', space=sflag, size = 0x4, scoped, tag = 'scoped memory for tpu_custom_call.1']
    #allocation6 [shape = 'u8[8192]{0}', space=vmem, size = 0x2000, scoped, tag = 'output window, operand 0, single buffered']
    %8 = vsyncpa [#allocation4], 0
    %9 = vsyncpa [#allocation5], 0
    // Predicated region
    $region2: #{tpu_custom_call.1} parent=1 // pred_check
      _
    $region3: #{tpu_custom_call.1} parent=1 // pred_check_branch
      %11 = sbr.rel (0) target = $region5
    $region4: #{tpu_custom_call.1} parent=1 // pred_region
      _
    $region5: #{tpu_custom_call.1} parent=1 // pred_fallthru
      _
    // Predicated region
    $region6: #{tpu_custom_call.1} parent=1 // pred_check
      _
    $region7: #{tpu_custom_call.1} parent=1 // pred_check_branch
      %13 = sbr.rel (0) target = $region9
    $region8: #{tpu_custom_call.1} parent=1 // pred_region
      %15 = vsyncadd [#allocation4], 0
      %s17 = sshll.u32 %s1, 4
      %s18 = int_to_ptr.hbm [resolvable:$true] %s17
      %s19 = sshll.u32 [#allocation3], 4
      %s20 = int_to_ptr.vmem [resolvable:$true] %s19
      %22 = dma.hbm_to_vmem [thread:$0]  %s18, 256, %s20, [#allocation4]
    $region9: #{tpu_custom_call.1} parent=1 // pred_fallthru
      _
    // Predicated region
    $region10: #{tpu_custom_call.1} parent=1 // pred_check
      _
    $region11: #{tpu_custom_call.1} parent=1 // pred_check_branch
      %24 = sbr.rel (0) target = $region13
    $region12: #{tpu_custom_call.1} parent=1 // pred_region
      %26 = dma.done [#allocation4], 256
    $region13: #{tpu_custom_call.1} parent=1 // pred_fallthru
      _
    %s27 = sld [smem:[#allocation2]]
    %s28 = smul.u32 %s27, 2654435769
    %s29 = sadd.s32 %s28, 2246822507
    %s30 = sadd.s32 %s28, 3266489909
    %s31 = smul.u32 0, 1024
    %v32 = vlaneseq
    %v33 = vshrl.u32 %v32, 7
    %v34 = vlaneseq
    %v35 = vand.u32 %v34, 127
    %v36 = vadd.s32 %v35, 128
    %v37 = vadd.s32 %v35, 256
    %v38 = vadd.s32 %v35, 384
    %v39 = vmul.u32 %v33, 512
    %v40 = vstv %s31
    %v41 = vadd.s32 %v40, %v39
    %v42 = vadd.s32 %v41, %v35
    %v43 = vadd.s32 %v41, %v36
    %v44 = vadd.s32 %v41, %v37
    %v45 = vadd.s32 %v41, %v38
    %v46 = vstv %s29
    %v47 = vxor.u32 %v42, %v46
    %v48 = vxor.u32 %v43, %v46
    %v49 = vxor.u32 %v44, %v46
    %v50 = vxor.u32 %v45, %v46
    %v51 = vmul.u32 %v47, 2146121005
    %v52 = vmul.u32 %v48, 2146121005
    %v53 = vmul.u32 %v49, 2146121005
    %v54 = vmul.u32 %v50, 2146121005
    %v55 = vshra.s32 %v51, 15
    %v56 = vshra.s32 %v52, 15
    %v57 = vshra.s32 %v53, 15
    %v58 = vshra.s32 %v54, 15
    %v59 = vand.u32 %v55, 131071
    %v60 = vand.u32 %v56, 131071
    %v61 = vand.u32 %v57, 131071
    %v62 = vand.u32 %v58, 131071
    %v63 = vxor.u32 %v51, %v59
    %v64 = vxor.u32 %v52, %v60
    %v65 = vxor.u32 %v53, %v61
    %v66 = vxor.u32 %v54, %v62
    %v67 = vmul.u32 %v63, 2221713035
    %v68 = vmul.u32 %v64, 2221713035
    %v69 = vmul.u32 %v65, 2221713035
    %v70 = vmul.u32 %v66, 2221713035
    %v71 = vshra.s32 %v67, 16
    %v72 = vshra.s32 %v68, 16
    %v73 = vshra.s32 %v69, 16
    %v74 = vshra.s32 %v70, 16
    %v75 = vand.u32 %v71, 65535
    %v76 = vand.u32 %v72, 65535
    %v77 = vand.u32 %v73, 65535
    %v78 = vand.u32 %v74, 65535
    %v79 = vxor.u32 %v67, %v75
    %v80 = vxor.u32 %v68, %v76
    %v81 = vxor.u32 %v69, %v77
    %v82 = vxor.u32 %v70, %v78
    %v83 = vmul.u32 %v79, 2654435761
    %v84 = vmul.u32 %v80, 2654435761
    %v85 = vmul.u32 %v81, 2654435761
    %v86 = vmul.u32 %v82, 2654435761
    %v87 = vshra.s32 %v83, 16
    %v88 = vshra.s32 %v84, 16
    %v89 = vshra.s32 %v85, 16
    %v90 = vshra.s32 %v86, 16
    %v91 = vand.u32 %v87, 65535
    %v92 = vand.u32 %v88, 65535
    %v93 = vand.u32 %v89, 65535
    %v94 = vand.u32 %v90, 65535
    %v95 = vxor.u32 %v83, %v91
    %v96 = vxor.u32 %v84, %v92
    %v97 = vxor.u32 %v85, %v93
    %v98 = vxor.u32 %v86, %v94
    %v99 = vshra.s32 %v95, 8
    %v100 = vshra.s32 %v96, 8
    %v101 = vshra.s32 %v97, 8
    %v102 = vshra.s32 %v98, 8
    %v103 = vand.u32 %v99, 16777215
    %v104 = vand.u32 %v100, 16777215
    %v105 = vand.u32 %v101, 16777215
    %v106 = vand.u32 %v102, 16777215
    %v107 = vcvt.s32.f32 %v103
    %v108 = vcvt.s32.f32 %v104
    %v109 = vcvt.s32.f32 %v105
    %v110 = vcvt.s32.f32 %v106
    %v111 = vadd.f32 %v107, 0.5
    %v112 = vadd.f32 %v108, 0.5
    %v113 = vadd.f32 %v109, 0.5
    %v114 = vadd.f32 %v110, 0.5
    %v115 = vmul.f32 %v111, 5.9604645e-08
    %v116 = vmul.f32 %v112, 5.9604645e-08
    %v117 = vmul.f32 %v113, 5.9604645e-08
    %v118 = vmul.f32 %v114, 5.9604645e-08
    %v119 = vstv %s30
    %v120 = vxor.u32 %v42, %v119
    %v121 = vxor.u32 %v43, %v119
    %v122 = vxor.u32 %v44, %v119
    %v123 = vxor.u32 %v45, %v119
    %v124 = vmul.u32 %v120, 2146121005
    %v125 = vmul.u32 %v121, 2146121005
    %v126 = vmul.u32 %v122, 2146121005
    %v127 = vmul.u32 %v123, 2146121005
    %v128 = vshra.s32 %v124, 15
    %v129 = vshra.s32 %v125, 15
    %v130 = vshra.s32 %v126, 15
    %v131 = vshra.s32 %v127, 15
    %v132 = vand.u32 %v128, 131071
    %v133 = vand.u32 %v129, 131071
    %v134 = vand.u32 %v130, 131071
    %v135 = vand.u32 %v131, 131071
    %v136 = vxor.u32 %v124, %v132
    %v137 = vxor.u32 %v125, %v133
    %v138 = vxor.u32 %v126, %v134
    %v139 = vxor.u32 %v127, %v135
    %v140 = vmul.u32 %v136, 2221713035
    %v141 = vmul.u32 %v137, 2221713035
    %v142 = vmul.u32 %v138, 2221713035
    %v143 = vmul.u32 %v139, 2221713035
    %v144 = vshra.s32 %v140, 16
    %v145 = vshra.s32 %v141, 16
    %v146 = vshra.s32 %v142, 16
    %v147 = vshra.s32 %v143, 16
    %v148 = vand.u32 %v144, 65535
    %v149 = vand.u32 %v145, 65535
    %v150 = vand.u32 %v146, 65535
    %v151 = vand.u32 %v147, 65535
    %v152 = vxor.u32 %v140, %v148
    %v153 = vxor.u32 %v141, %v149
    %v154 = vxor.u32 %v142, %v150
    %v155 = vxor.u32 %v143, %v151
    %v156 = vmul.u32 %v152, 2654435761
    %v157 = vmul.u32 %v153, 2654435761
    %v158 = vmul.u32 %v154, 2654435761
    %v159 = vmul.u32 %v155, 2654435761
    %v160 = vshra.s32 %v156, 16
    %v161 = vshra.s32 %v157, 16
    %v162 = vshra.s32 %v158, 16
    %v163 = vshra.s32 %v159, 16
    %v164 = vand.u32 %v160, 65535
    %v165 = vand.u32 %v161, 65535
    %v166 = vand.u32 %v162, 65535
    %v167 = vand.u32 %v163, 65535
    %v168 = vxor.u32 %v156, %v164
    %v169 = vxor.u32 %v157, %v165
    %v170 = vxor.u32 %v158, %v166
    %v171 = vxor.u32 %v159, %v167
    %v172 = vshra.s32 %v168, 8
    %v173 = vshra.s32 %v169, 8
    %v174 = vshra.s32 %v170, 8
    %v175 = vshra.s32 %v171, 8
    %v176 = vand.u32 %v172, 16777215
    %v177 = vand.u32 %v173, 16777215
    %v178 = vand.u32 %v174, 16777215
    %v179 = vand.u32 %v175, 16777215
    %v180 = vcvt.s32.f32 %v176
    %v181 = vcvt.s32.f32 %v177
    %v182 = vcvt.s32.f32 %v178
    %v183 = vcvt.s32.f32 %v179
    %v184 = vadd.f32 %v180, 0.5
    %v185 = vadd.f32 %v181, 0.5
    %v186 = vadd.f32 %v182, 0.5
    %v187 = vadd.f32 %v183, 0.5
    %v188 = vmul.f32 %v184, 5.9604645e-08
    %v189 = vmul.f32 %v185, 5.9604645e-08
    %v190 = vmul.f32 %v186, 5.9604645e-08
    %v191 = vmul.f32 %v187, 5.9604645e-08
    %v192 = vlog2.pop %v115
    %v193 = vmul.f32 %v192, 0.6931472
    %v194 = vlog2.pop %v116
    %v195 = vmul.f32 %v194, 0.6931472
    %v196 = vlog2.pop %v117
    %v197 = vmul.f32 %v196, 0.6931472
    %v198 = vlog2.pop %v118
    %v199 = vmul.f32 %v198, 0.6931472
    %v200 = vmul.f32 %v193, -2.0
    %v201 = vmul.f32 %v195, -2.0
    %v202 = vmul.f32 %v197, -2.0
    %v203 = vmul.f32 %v199, -2.0
    %v204 = vrsqrt.pop %v200
    %v205 = vmul.f32 %v204, %v200
    %v206 = vmul.f32 %v205, %v204
    %v207 = vmul.f32 0.5, %v206
    %v208 = vsub.f32 1.5, %v207
    %v209 = vmul.f32 %v204, %v208
    %v210 = vmul.f32 %v200, %v209
    %vm211 = vcmp.eq.f32.partialorder %v200, inf
    %v212 = vsel %vm211, %v200, %v210
    %vm213 = vcmp.eq.f32.partialorder %v200, 0.0
    %v214 = vand.u32 %v200, 2147483648
    %v215 = vsel %vm213, %v214, %v212
    %v216 = vrsqrt.pop %v201
    %v217 = vmul.f32 %v216, %v201
    %v218 = vmul.f32 %v217, %v216
    %v219 = vmul.f32 0.5, %v218
    %v220 = vsub.f32 1.5, %v219
    %v221 = vmul.f32 %v216, %v220
    %v222 = vmul.f32 %v201, %v221
    %vm223 = vcmp.eq.f32.partialorder %v201, inf
    %v224 = vsel %vm223, %v201, %v222
    %vm225 = vcmp.eq.f32.partialorder %v201, 0.0
    %v226 = vand.u32 %v201, 2147483648
    %v227 = vsel %vm225, %v226, %v224
    %v228 = vrsqrt.pop %v202
    %v229 = vmul.f32 %v228, %v202
    %v230 = vmul.f32 %v229, %v228
    %v231 = vmul.f32 0.5, %v230
    %v232 = vsub.f32 1.5, %v231
    %v233 = vmul.f32 %v228, %v232
    %v234 = vmul.f32 %v202, %v233
    %vm235 = vcmp.eq.f32.partialorder %v202, inf
    %v236 = vsel %vm235, %v202, %v234
    %vm237 = vcmp.eq.f32.partialorder %v202, 0.0
    %v238 = vand.u32 %v202, 2147483648
    %v239 = vsel %vm237, %v238, %v236
    %v240 = vrsqrt.pop %v203
    %v241 = vmul.f32 %v240, %v203
    %v242 = vmul.f32 %v241, %v240
    %v243 = vmul.f32 0.5, %v242
    %v244 = vsub.f32 1.5, %v243
    %v245 = vmul.f32 %v240, %v244
    %v246 = vmul.f32 %v203, %v245
    %vm247 = vcmp.eq.f32.partialorder %v203, inf
    %v248 = vsel %vm247, %v203, %v246
    %vm249 = vcmp.eq.f32.partialorder %v203, 0.0
    %v250 = vand.u32 %v203, 2147483648
    %v251 = vsel %vm249, %v250, %v248
    %v252 = vmul.f32 %v215, 0.2
    %v253 = vmul.f32 %v227, 0.2
    %v254 = vmul.f32 %v239, 0.2
    %v255 = vmul.f32 %v251, 0.2
    %v256 = vmul.f32 %v188, 6.2831855
    %v257 = vmul.f32 %v189, 6.2831855
    %v258 = vmul.f32 %v190, 6.2831855
    %v259 = vmul.f32 %v191, 6.2831855
    %v260 = vand.u32 2147483647, %v256
    %vm261 = vcmp.le.f32.partialorder %v260, 0.7853982
    %vm262 = vcmp.lt.s32.totalorder %v256, 0
    %v263 = vand.u32 %v256, 2139095040
    %v264 = vshrl.u32 %v263, 23
    %v265 = vsub.s32 %v264, 127
    %v266 = vand.u32 2147483647, %v256
    %v267 = vand.u32 %v266, 8388607
    %v268 = vor.u32 %v267, 8388608
    %v269 = vsub.s32 0, %v268
    %v270 = vadd.s32 %v265, 1
    %vm271 = vcmp.gt.s32.totalorder %v270, 0
    %v272 = vsel %vm271, %v270, 0
    %v273 = vshrl.u32 %v272, 5
    %v274 = vand.u32 %v272, 31
    %v275 = vsub.s32 32, %v274
    %v276 = vshrl.u32 683565275, %v275
    %v277 = vshll.u32 683565275, %v274
    %v278 = vshrl.u32 2475754826, %v275
    %v279 = vor.u32 %v277, %v278
    %v280 = vshll.u32 2475754826, %v274
    %v281 = vshrl.u32 2131351028, %v275
    %v282 = vor.u32 %v280, %v281
    %v283 = vshll.u32 2131351028, %v274
    %v284 = vshrl.u32 2102212464, %v275
    %v285 = vor.u32 %v283, %v284
    %v286 = vshll.u32 2102212464, %v274
    %v287 = vshrl.u32 920167782, %v275
    %v288 = vor.u32 %v286, %v287
    %v289 = vshll.u32 920167782, %v274
    %v290 = vshrl.u32 1326507024, %v275
    %v291 = vor.u32 %v289, %v290
    %vm292 = vcmp.lt.s32.totalorder %v273, 1
    %vm293 = vcmp.lt.s32.totalorder %v273, 2
    %vm294 = vcmp.lt.s32.totalorder %v273, 3
    %vm295 = vcmp.lt.s32.totalorder %v273, 4
    %v296 = vsel %vm292, %v276, %v279
    %v297 = vsel %vm295, %v285, 2102212464
    %v298 = vsel %vm294, %v282, %v297
    %v299 = vsel %vm293, %v296, %v298
    %v300 = vsel %vm292, %v279, %v282
    %v301 = vsel %vm295, %v288, 920167782
    %v302 = vsel %vm294, %v285, %v301
    %v303 = vsel %vm293, %v300, %v302
    %v304 = vsel %vm292, %v282, %v285
    %v305 = vsel %vm295, %v291, 1326507024
    %v306 = vsel %vm294, %v288, %v305
    %v307 = vsel %vm293, %v304, %v306
    %v308 = vshll.u32 %v268, 8
    %v309 = vand.u32 %v308, 65535
    %v310 = vshrl.u32 %v308, 16
    %v311 = vand.u32 %v307, 65535
    %v312 = vshrl.u32 %v307, 16
    %v313 = vmul.u32 %v309, %v311
    %v314 = vmul.u32 %v309, %v312
    %v315 = vmul.u32 %v310, %v311
    %v316 = vmul.u32 %v310, %v312
    %v317 = vshll.u32 %v314, 16
    %v318 = vshrl.u32 %v314, 16
    %v319 = vshll.u32 %v315, 16
    %v320 = vshrl.u32 %v315, 16
    %vm321 = vc.u32 %v313, %v317
    %v322 = vsel %vm321, 1, 0
    %v323 = vadd.s32 %v313, %v317
    %v324 = vadd.s32 %v316, %v322
    %vm325 = vc.u32 %v323, %v319
    %v326 = vsel %vm325, 1, 0
    %v327 = vadd.s32 %v323, %v319
    %v328 = vadd.s32 %v324, %v326
    %v329 = vadd.s32 %v328, %v318
    %v330 = vadd.s32 %v329, %v320
    %v331 = vand.u32 %v308, 65535
    %v332 = vshrl.u32 %v308, 16
    %v333 = vand.u32 %v303, 65535
    %v334 = vshrl.u32 %v303, 16
    %v335 = vmul.u32 %v331, %v333
    %v336 = vmul.u32 %v331, %v334
    %v337 = vmul.u32 %v332, %v333
    %v338 = vmul.u32 %v332, %v334
    %v339 = vshll.u32 %v336, 16
    %v340 = vshrl.u32 %v336, 16
    %v341 = vshll.u32 %v337, 16
    %v342 = vshrl.u32 %v337, 16
    %vm343 = vc.u32 %v335, %v339
    %v344 = vsel %vm343, 1, 0
    %v345 = vadd.s32 %v335, %v339
    %v346 = vadd.s32 %v338, %v344
    %vm347 = vc.u32 %v345, %v341
    %v348 = vsel %vm347, 1, 0
    %v349 = vadd.s32 %v345, %v341
    %v350 = vadd.s32 %v346, %v348
    %v351 = vadd.s32 %v350, %v340
    %v352 = vadd.s32 %v351, %v342
    %v353 = vmul.u32 %v308, %v299
    %v354 = vadd.s32 %v330, %v349
    %vm355 = vc.u32 %v330, %v349
    %v356 = vadd.s32 %v352, 1
    %v357 = vsel %vm355, %v356, %v352
    %v358 = vadd.s32 %v353, %v357
    %v359 = vadd.s32 %v358, 536870912
    %v360 = vshrl.u32 %v359, 30
    %v361 = vshll.u32 %v360, 30
    %v362 = vsub.s32 %v358, %v361
    %vm363 = vcmp.lt.s32.totalorder %v362, 0
    %v364 = vsub.s32 0, %v362
    %v365 = vsel %vm363, %v364, %v362
    %v366 = vclz %v365
    %v367 = vsub.s32 %v366, 2
    %vm368 = vcmp.gt.s32.totalorder 0, %v367
    %v369 = vsel %vm368, 0, %v367
    %v370 = vsub.s32 32, %v369
    %v371 = vshll.u32 %v362, %v369
    %v372 = vshrl.u32 %v354, %v370
    %v373 = vor.u32 %v371, %v372
    %v374 = vsub.s32 4294967266, %v369
    %v375 = vadd.s32 %v374, 127
    %v376 = vshll.u32 %v375, 23
    %v377 = vor.u32 4788187, %v376
    %v378 = vand.u32 2147483647, %v377
    %v380 = vcvt.s32.f32 %v373
    %v381 = vmul.f32 %v380, %v378
    %v382 = vxor.u32 %v381, 2147483648
    %v383 = vsel %vm262, %v382, %v381
    %v384 = vsub.s32 4, %v360
    %v385 = vsel %vm262, %v384, %v360
    %v386 = vsel %vm261, %v256, %v383
    %v387 = vsel %vm261, 0, %v385
    %v388 = vmul.f32 %v386, %v386
    %v389 = vmul.f32 %v388, -0.001358992
    %v390 = vadd.f32 %v389, 0.041655596
    %v391 = vmul.f32 %v388, %v390
    %v392 = vadd.f32 %v391, -0.4999988
    %v393 = vmul.f32 %v388, %v392
    %v394 = vadd.f32 1.0, %v393
    %v395 = vmul.f32 %v386, %v386
    %v396 = vmul.f32 %v395, -0.00019511016
    %v397 = vadd.f32 %v396, 0.008332121
    %v398 = vmul.f32 %v395, %v397
    %v399 = vadd.f32 %v398, -0.16666654
    %v400 = vmul.f32 %v395, %v399
    %v401 = vadd.f32 %v400, 1.0
    %v402 = vmul.f32 %v401, %v386
    %vm403 = vweird.f32 %v256
    %v404 = vand.u32 %v387, 3
    %vm405 = vcmp.lt.s32.totalorder %v404, 2
    %vm406 = vcmp.eq.s32.totalorder %v404, 0
    %v407 = vxor.u32 %v402, 2147483648
    %v408 = vsel %vm406, %v394, %v407
    %vm409 = vcmp.eq.s32.totalorder %v404, 2
    %v410 = vxor.u32 %v394, 2147483648
    %v411 = vsel %vm409, %v410, %v402
    %v412 = vsel %vm405, %v408, %v411
    %v413 = vsel %vm403, nan, %v412
    %v414 = vand.u32 2147483647, %v257
    %vm415 = vcmp.le.f32.partialorder %v414, 0.7853982
    %vm416 = vcmp.lt.s32.totalorder %v257, 0
    %v417 = vand.u32 %v257, 2139095040
    %v418 = vshrl.u32 %v417, 23
    %v419 = vsub.s32 %v418, 127
    %v420 = vand.u32 2147483647, %v257
    %v421 = vand.u32 %v420, 8388607
    %v422 = vor.u32 %v421, 8388608
    %v423 = vsub.s32 0, %v422
    %v424 = vadd.s32 %v419, 1
    %vm425 = vcmp.gt.s32.totalorder %v424, 0
    %v426 = vsel %vm425, %v424, 0
    %v427 = vshrl.u32 %v426, 5
    %v428 = vand.u32 %v426, 31
    %v429 = vsub.s32 32, %v428
    %v430 = vshrl.u32 683565275, %v429
    %v431 = vshll.u32 683565275, %v428
    %v432 = vshrl.u32 2475754826, %v429
    %v433 = vor.u32 %v431, %v432
    %v434 = vshll.u32 2475754826, %v428
    %v435 = vshrl.u32 2131351028, %v429
    %v436 = vor.u32 %v434, %v435
    %v437 = vshll.u32 2131351028, %v428
    %v438 = vshrl.u32 2102212464, %v429
    %v439 = vor.u32 %v437, %v438
    %v440 = vshll.u32 2102212464, %v428
    %v441 = vshrl.u32 920167782, %v429
    %v442 = vor.u32 %v440, %v441
    %v443 = vshll.u32 920167782, %v428
    %v444 = vshrl.u32 1326507024, %v429
    %v445 = vor.u32 %v443, %v444
    %vm446 = vcmp.lt.s32.totalorder %v427, 1
    %vm447 = vcmp.lt.s32.totalorder %v427, 2
    %vm448 = vcmp.lt.s32.totalorder %v427, 3
    %vm449 = vcmp.lt.s32.totalorder %v427, 4
    %v450 = vsel %vm446, %v430, %v433
    %v451 = vsel %vm449, %v439, 2102212464
    %v452 = vsel %vm448, %v436, %v451
    %v453 = vsel %vm447, %v450, %v452
    %v454 = vsel %vm446, %v433, %v436
    %v455 = vsel %vm449, %v442, 920167782
    %v456 = vsel %vm448, %v439, %v455
    %v457 = vsel %vm447, %v454, %v456
    %v458 = vsel %vm446, %v436, %v439
    %v459 = vsel %vm449, %v445, 1326507024
    %v460 = vsel %vm448, %v442, %v459
    %v461 = vsel %vm447, %v458, %v460
    %v462 = vshll.u32 %v422, 8
    %v463 = vand.u32 %v462, 65535
    %v464 = vshrl.u32 %v462, 16
    %v465 = vand.u32 %v461, 65535
    %v466 = vshrl.u32 %v461, 16
    %v467 = vmul.u32 %v463, %v465
    %v468 = vmul.u32 %v463, %v466
    %v469 = vmul.u32 %v464, %v465
    %v470 = vmul.u32 %v464, %v466
    %v471 = vshll.u32 %v468, 16
    %v472 = vshrl.u32 %v468, 16
    %v473 = vshll.u32 %v469, 16
    %v474 = vshrl.u32 %v469, 16
    %vm475 = vc.u32 %v467, %v471
    %v476 = vsel %vm475, 1, 0
    %v477 = vadd.s32 %v467, %v471
    %v478 = vadd.s32 %v470, %v476
    %vm479 = vc.u32 %v477, %v473
    %v480 = vsel %vm479, 1, 0
    %v481 = vadd.s32 %v477, %v473
    %v482 = vadd.s32 %v478, %v480
    %v483 = vadd.s32 %v482, %v472
    %v484 = vadd.s32 %v483, %v474
    %v485 = vand.u32 %v462, 65535
    %v486 = vshrl.u32 %v462, 16
    %v487 = vand.u32 %v457, 65535
    %v488 = vshrl.u32 %v457, 16
    %v489 = vmul.u32 %v485, %v487
    %v490 = vmul.u32 %v485, %v488
    %v491 = vmul.u32 %v486, %v487
    %v492 = vmul.u32 %v486, %v488
    %v493 = vshll.u32 %v490, 16
    %v494 = vshrl.u32 %v490, 16
    %v495 = vshll.u32 %v491, 16
    %v496 = vshrl.u32 %v491, 16
    %vm497 = vc.u32 %v489, %v493
    %v498 = vsel %vm497, 1, 0
    %v499 = vadd.s32 %v489, %v493
    %v500 = vadd.s32 %v492, %v498
    %vm501 = vc.u32 %v499, %v495
    %v502 = vsel %vm501, 1, 0
    %v503 = vadd.s32 %v499, %v495
    %v504 = vadd.s32 %v500, %v502
    %v505 = vadd.s32 %v504, %v494
    %v506 = vadd.s32 %v505, %v496
    %v507 = vmul.u32 %v462, %v453
    %v508 = vadd.s32 %v484, %v503
    %vm509 = vc.u32 %v484, %v503
    %v510 = vadd.s32 %v506, 1
    %v511 = vsel %vm509, %v510, %v506
    %v512 = vadd.s32 %v507, %v511
    %v513 = vadd.s32 %v512, 536870912
    %v514 = vshrl.u32 %v513, 30
    %v515 = vshll.u32 %v514, 30
    %v516 = vsub.s32 %v512, %v515
    %vm517 = vcmp.lt.s32.totalorder %v516, 0
    %v518 = vsub.s32 0, %v516
    %v519 = vsel %vm517, %v518, %v516
    %v520 = vclz %v519
    %v521 = vsub.s32 %v520, 2
    %vm522 = vcmp.gt.s32.totalorder 0, %v521
    %v523 = vsel %vm522, 0, %v521
    %v524 = vsub.s32 32, %v523
    %v525 = vshll.u32 %v516, %v523
    %v526 = vshrl.u32 %v508, %v524
    %v527 = vor.u32 %v525, %v526
    %v528 = vsub.s32 4294967266, %v523
    %v529 = vadd.s32 %v528, 127
    %v530 = vshll.u32 %v529, 23
    %v531 = vor.u32 4788187, %v530
    %v532 = vand.u32 2147483647, %v531
    %v534 = vcvt.s32.f32 %v527
    %v535 = vmul.f32 %v534, %v532
    %v536 = vxor.u32 %v535, 2147483648
    %v537 = vsel %vm416, %v536, %v535
    %v538 = vsub.s32 4, %v514
    %v539 = vsel %vm416, %v538, %v514
    %v540 = vsel %vm415, %v257, %v537
    %v541 = vsel %vm415, 0, %v539
    %v542 = vmul.f32 %v540, %v540
    %v543 = vmul.f32 %v542, -0.001358992
    %v544 = vadd.f32 %v543, 0.041655596
    %v545 = vmul.f32 %v542, %v544
    %v546 = vadd.f32 %v545, -0.4999988
    %v547 = vmul.f32 %v542, %v546
    %v548 = vadd.f32 1.0, %v547
    %v549 = vmul.f32 %v540, %v540
    %v550 = vmul.f32 %v549, -0.00019511016
    %v551 = vadd.f32 %v550, 0.008332121
    %v552 = vmul.f32 %v549, %v551
    %v553 = vadd.f32 %v552, -0.16666654
    %v554 = vmul.f32 %v549, %v553
    %v555 = vadd.f32 %v554, 1.0
    %v556 = vmul.f32 %v555, %v540
    %vm557 = vweird.f32 %v257
    %v558 = vand.u32 %v541, 3
    %vm559 = vcmp.lt.s32.totalorder %v558, 2
    %vm560 = vcmp.eq.s32.totalorder %v558, 0
    %v561 = vxor.u32 %v556, 2147483648
    %v562 = vsel %vm560, %v548, %v561
    %vm563 = vcmp.eq.s32.totalorder %v558, 2
    %v564 = vxor.u32 %v548, 2147483648
    %v565 = vsel %vm563, %v564, %v556
    %v566 = vsel %vm559, %v562, %v565
    %v567 = vsel %vm557, nan, %v566
    %v568 = vand.u32 2147483647, %v258
    %vm569 = vcmp.le.f32.partialorder %v568, 0.7853982
    %vm570 = vcmp.lt.s32.totalorder %v258, 0
    %v571 = vand.u32 %v258, 2139095040
    %v572 = vshrl.u32 %v571, 23
    %v573 = vsub.s32 %v572, 127
    %v574 = vand.u32 2147483647, %v258
    %v575 = vand.u32 %v574, 8388607
    %v576 = vor.u32 %v575, 8388608
    %v577 = vsub.s32 0, %v576
    %v578 = vadd.s32 %v573, 1
    %vm579 = vcmp.gt.s32.totalorder %v578, 0
    %v580 = vsel %vm579, %v578, 0
    %v581 = vshrl.u32 %v580, 5
    %v582 = vand.u32 %v580, 31
    %v583 = vsub.s32 32, %v582
    %v584 = vshrl.u32 683565275, %v583
    %v585 = vshll.u32 683565275, %v582
    %v586 = vshrl.u32 2475754826, %v583
    %v587 = vor.u32 %v585, %v586
    %v588 = vshll.u32 2475754826, %v582
    %v589 = vshrl.u32 2131351028, %v583
    %v590 = vor.u32 %v588, %v589
    %v591 = vshll.u32 2131351028, %v582
    %v592 = vshrl.u32 2102212464, %v583
    %v593 = vor.u32 %v591, %v592
    %v594 = vshll.u32 2102212464, %v582
    %v595 = vshrl.u32 920167782, %v583
    %v596 = vor.u32 %v594, %v595
    %v597 = vshll.u32 920167782, %v582
    %v598 = vshrl.u32 1326507024, %v583
    %v599 = vor.u32 %v597, %v598
    %vm600 = vcmp.lt.s32.totalorder %v581, 1
    %vm601 = vcmp.lt.s32.totalorder %v581, 2
    %vm602 = vcmp.lt.s32.totalorder %v581, 3
    %vm603 = vcmp.lt.s32.totalorder %v581, 4
    %v604 = vsel %vm600, %v584, %v587
    %v605 = vsel %vm603, %v593, 2102212464
    %v606 = vsel %vm602, %v590, %v605
    %v607 = vsel %vm601, %v604, %v606
    %v608 = vsel %vm600, %v587, %v590
    %v609 = vsel %vm603, %v596, 920167782
    %v610 = vsel %vm602, %v593, %v609
    %v611 = vsel %vm601, %v608, %v610
    %v612 = vsel %vm600, %v590, %v593
    %v613 = vsel %vm603, %v599, 1326507024
    %v614 = vsel %vm602, %v596, %v613
    %v615 = vsel %vm601, %v612, %v614
    %v616 = vshll.u32 %v576, 8
    %v617 = vand.u32 %v616, 65535
    %v618 = vshrl.u32 %v616, 16
    %v619 = vand.u32 %v615, 65535
    %v620 = vshrl.u32 %v615, 16
    %v621 = vmul.u32 %v617, %v619
    %v622 = vmul.u32 %v617, %v620
    %v623 = vmul.u32 %v618, %v619
    %v624 = vmul.u32 %v618, %v620
    %v625 = vshll.u32 %v622, 16
    %v626 = vshrl.u32 %v622, 16
    %v627 = vshll.u32 %v623, 16
    %v628 = vshrl.u32 %v623, 16
    %vm629 = vc.u32 %v621, %v625
    %v630 = vsel %vm629, 1, 0
    %v631 = vadd.s32 %v621, %v625
    %v632 = vadd.s32 %v624, %v630
    %vm633 = vc.u32 %v631, %v627
    %v634 = vsel %vm633, 1, 0
    %v635 = vadd.s32 %v631, %v627
    %v636 = vadd.s32 %v632, %v634
    %v637 = vadd.s32 %v636, %v626
    %v638 = vadd.s32 %v637, %v628
    %v639 = vand.u32 %v616, 65535
    %v640 = vshrl.u32 %v616, 16
    %v641 = vand.u32 %v611, 65535
    %v642 = vshrl.u32 %v611, 16
    %v643 = vmul.u32 %v639, %v641
    %v644 = vmul.u32 %v639, %v642
    %v645 = vmul.u32 %v640, %v641
    %v646 = vmul.u32 %v640, %v642
    %v647 = vshll.u32 %v644, 16
    %v648 = vshrl.u32 %v644, 16
    %v649 = vshll.u32 %v645, 16
    %v650 = vshrl.u32 %v645, 16
    %vm651 = vc.u32 %v643, %v647
    %v652 = vsel %vm651, 1, 0
    %v653 = vadd.s32 %v643, %v647
    %v654 = vadd.s32 %v646, %v652
    %vm655 = vc.u32 %v653, %v649
    %v656 = vsel %vm655, 1, 0
    %v657 = vadd.s32 %v653, %v649
    %v658 = vadd.s32 %v654, %v656
    %v659 = vadd.s32 %v658, %v648
    %v660 = vadd.s32 %v659, %v650
    %v661 = vmul.u32 %v616, %v607
    %v662 = vadd.s32 %v638, %v657
    %vm663 = vc.u32 %v638, %v657
    %v664 = vadd.s32 %v660, 1
    %v665 = vsel %vm663, %v664, %v660
    %v666 = vadd.s32 %v661, %v665
    %v667 = vadd.s32 %v666, 536870912
    %v668 = vshrl.u32 %v667, 30
    %v669 = vshll.u32 %v668, 30
    %v670 = vsub.s32 %v666, %v669
    %vm671 = vcmp.lt.s32.totalorder %v670, 0
    %v672 = vsub.s32 0, %v670
    %v673 = vsel %vm671, %v672, %v670
    %v674 = vclz %v673
    %v675 = vsub.s32 %v674, 2
    %vm676 = vcmp.gt.s32.totalorder 0, %v675
    %v677 = vsel %vm676, 0, %v675
    %v678 = vsub.s32 32, %v677
    %v679 = vshll.u32 %v670, %v677
    %v680 = vshrl.u32 %v662, %v678
    %v681 = vor.u32 %v679, %v680
    %v682 = vsub.s32 4294967266, %v677
    %v683 = vadd.s32 %v682, 127
    %v684 = vshll.u32 %v683, 23
    %v685 = vor.u32 4788187, %v684
    %v686 = vand.u32 2147483647, %v685
    %v688 = vcvt.s32.f32 %v681
    %v689 = vmul.f32 %v688, %v686
    %v690 = vxor.u32 %v689, 2147483648
    %v691 = vsel %vm570, %v690, %v689
    %v692 = vsub.s32 4, %v668
    %v693 = vsel %vm570, %v692, %v668
    %v694 = vsel %vm569, %v258, %v691
    %v695 = vsel %vm569, 0, %v693
    %v696 = vmul.f32 %v694, %v694
    %v697 = vmul.f32 %v696, -0.001358992
    %v698 = vadd.f32 %v697, 0.041655596
    %v699 = vmul.f32 %v696, %v698
    %v700 = vadd.f32 %v699, -0.4999988
    %v701 = vmul.f32 %v696, %v700
    %v702 = vadd.f32 1.0, %v701
    %v703 = vmul.f32 %v694, %v694
    %v704 = vmul.f32 %v703, -0.00019511016
    %v705 = vadd.f32 %v704, 0.008332121
    %v706 = vmul.f32 %v703, %v705
    %v707 = vadd.f32 %v706, -0.16666654
    %v708 = vmul.f32 %v703, %v707
    %v709 = vadd.f32 %v708, 1.0
    %v710 = vmul.f32 %v709, %v694
    %vm711 = vweird.f32 %v258
    %v712 = vand.u32 %v695, 3
    %vm713 = vcmp.lt.s32.totalorder %v712, 2
    %vm714 = vcmp.eq.s32.totalorder %v712, 0
    %v715 = vxor.u32 %v710, 2147483648
    %v716 = vsel %vm714, %v702, %v715
    %vm717 = vcmp.eq.s32.totalorder %v712, 2
    %v718 = vxor.u32 %v702, 2147483648
    %v719 = vsel %vm717, %v718, %v710
    %v720 = vsel %vm713, %v716, %v719
    %v721 = vsel %vm711, nan, %v720
    %v722 = vand.u32 2147483647, %v259
    %vm723 = vcmp.le.f32.partialorder %v722, 0.7853982
    %vm724 = vcmp.lt.s32.totalorder %v259, 0
    %v725 = vand.u32 %v259, 2139095040
    %v726 = vshrl.u32 %v725, 23
    %v727 = vsub.s32 %v726, 127
    %v728 = vand.u32 2147483647, %v259
    %v729 = vand.u32 %v728, 8388607
    %v730 = vor.u32 %v729, 8388608
    %v731 = vsub.s32 0, %v730
    %v732 = vadd.s32 %v727, 1
    %vm733 = vcmp.gt.s32.totalorder %v732, 0
    %v734 = vsel %vm733, %v732, 0
    %v735 = vshrl.u32 %v734, 5
    %v736 = vand.u32 %v734, 31
    %v737 = vsub.s32 32, %v736
    %v738 = vshrl.u32 683565275, %v737
    %v739 = vshll.u32 683565275, %v736
    %v740 = vshrl.u32 2475754826, %v737
    %v741 = vor.u32 %v739, %v740
    %v742 = vshll.u32 2475754826, %v736
    %v743 = vshrl.u32 2131351028, %v737
    %v744 = vor.u32 %v742, %v743
    %v745 = vshll.u32 2131351028, %v736
    %v746 = vshrl.u32 2102212464, %v737
    %v747 = vor.u32 %v745, %v746
    %v748 = vshll.u32 2102212464, %v736
    %v749 = vshrl.u32 920167782, %v737
    %v750 = vor.u32 %v748, %v749
    %v751 = vshll.u32 920167782, %v736
    %v752 = vshrl.u32 1326507024, %v737
    %v753 = vor.u32 %v751, %v752
    %vm754 = vcmp.lt.s32.totalorder %v735, 1
    %vm755 = vcmp.lt.s32.totalorder %v735, 2
    %vm756 = vcmp.lt.s32.totalorder %v735, 3
    %vm757 = vcmp.lt.s32.totalorder %v735, 4
    %v758 = vsel %vm754, %v738, %v741
    %v759 = vsel %vm757, %v747, 2102212464
    %v760 = vsel %vm756, %v744, %v759
    %v761 = vsel %vm755, %v758, %v760
    %v762 = vsel %vm754, %v741, %v744
    %v763 = vsel %vm757, %v750, 920167782
    %v764 = vsel %vm756, %v747, %v763
    %v765 = vsel %vm755, %v762, %v764
    %v766 = vsel %vm754, %v744, %v747
    %v767 = vsel %vm757, %v753, 1326507024
    %v768 = vsel %vm756, %v750, %v767
    %v769 = vsel %vm755, %v766, %v768
    %v770 = vshll.u32 %v730, 8
    %v771 = vand.u32 %v770, 65535
    %v772 = vshrl.u32 %v770, 16
    %v773 = vand.u32 %v769, 65535
    %v774 = vshrl.u32 %v769, 16
    %v775 = vmul.u32 %v771, %v773
    %v776 = vmul.u32 %v771, %v774
    %v777 = vmul.u32 %v772, %v773
    %v778 = vmul.u32 %v772, %v774
    %v779 = vshll.u32 %v776, 16
    %v780 = vshrl.u32 %v776, 16
    %v781 = vshll.u32 %v777, 16
    %v782 = vshrl.u32 %v777, 16
    %vm783 = vc.u32 %v775, %v779
    %v784 = vsel %vm783, 1, 0
    %v785 = vadd.s32 %v775, %v779
    %v786 = vadd.s32 %v778, %v784
    %vm787 = vc.u32 %v785, %v781
    %v788 = vsel %vm787, 1, 0
    %v789 = vadd.s32 %v785, %v781
    %v790 = vadd.s32 %v786, %v788
    %v791 = vadd.s32 %v790, %v780
    %v792 = vadd.s32 %v791, %v782
    %v793 = vand.u32 %v770, 65535
    %v794 = vshrl.u32 %v770, 16
    %v795 = vand.u32 %v765, 65535
    %v796 = vshrl.u32 %v765, 16
    %v797 = vmul.u32 %v793, %v795
    %v798 = vmul.u32 %v793, %v796
    %v799 = vmul.u32 %v794, %v795
    %v800 = vmul.u32 %v794, %v796
    %v801 = vshll.u32 %v798, 16
    %v802 = vshrl.u32 %v798, 16
    %v803 = vshll.u32 %v799, 16
    %v804 = vshrl.u32 %v799, 16
    %vm805 = vc.u32 %v797, %v801
    %v806 = vsel %vm805, 1, 0
    %v807 = vadd.s32 %v797, %v801
    %v808 = vadd.s32 %v800, %v806
    %vm809 = vc.u32 %v807, %v803
    %v810 = vsel %vm809, 1, 0
    %v811 = vadd.s32 %v807, %v803
    %v812 = vadd.s32 %v808, %v810
    %v813 = vadd.s32 %v812, %v802
    %v814 = vadd.s32 %v813, %v804
    %v815 = vmul.u32 %v770, %v761
    %v816 = vadd.s32 %v792, %v811
    %vm817 = vc.u32 %v792, %v811
    %v818 = vadd.s32 %v814, 1
    %v819 = vsel %vm817, %v818, %v814
    %v820 = vadd.s32 %v815, %v819
    %v821 = vadd.s32 %v820, 536870912
    %v822 = vshrl.u32 %v821, 30
    %v823 = vshll.u32 %v822, 30
    %v824 = vsub.s32 %v820, %v823
    %vm825 = vcmp.lt.s32.totalorder %v824, 0
    %v826 = vsub.s32 0, %v824
    %v827 = vsel %vm825, %v826, %v824
    %v828 = vclz %v827
    %v829 = vsub.s32 %v828, 2
    %vm830 = vcmp.gt.s32.totalorder 0, %v829
    %v831 = vsel %vm830, 0, %v829
    %v832 = vsub.s32 32, %v831
    %v833 = vshll.u32 %v824, %v831
    %v834 = vshrl.u32 %v816, %v832
    %v835 = vor.u32 %v833, %v834
    %v836 = vsub.s32 4294967266, %v831
    %v837 = vadd.s32 %v836, 127
    %v838 = vshll.u32 %v837, 23
    %v839 = vor.u32 4788187, %v838
    %v840 = vand.u32 2147483647, %v839
    %v842 = vcvt.s32.f32 %v835
    %v843 = vmul.f32 %v842, %v840
    %v844 = vxor.u32 %v843, 2147483648
    %v845 = vsel %vm724, %v844, %v843
    %v846 = vsub.s32 4, %v822
    %v847 = vsel %vm724, %v846, %v822
    %v848 = vsel %vm723, %v259, %v845
    %v849 = vsel %vm723, 0, %v847
    %v850 = vmul.f32 %v848, %v848
    %v851 = vmul.f32 %v850, -0.001358992
    %v852 = vadd.f32 %v851, 0.041655596
    %v853 = vmul.f32 %v850, %v852
    %v854 = vadd.f32 %v853, -0.4999988
    %v855 = vmul.f32 %v850, %v854
    %v856 = vadd.f32 1.0, %v855
    %v857 = vmul.f32 %v848, %v848
    %v858 = vmul.f32 %v857, -0.00019511016
    %v859 = vadd.f32 %v858, 0.008332121
    %v860 = vmul.f32 %v857, %v859
    %v861 = vadd.f32 %v860, -0.16666654
    %v862 = vmul.f32 %v857, %v861
    %v863 = vadd.f32 %v862, 1.0
    %v864 = vmul.f32 %v863, %v848
    %vm865 = vweird.f32 %v259
    %v866 = vand.u32 %v849, 3
    %vm867 = vcmp.lt.s32.totalorder %v866, 2
    %vm868 = vcmp.eq.s32.totalorder %v866, 0
    %v869 = vxor.u32 %v864, 2147483648
    %v870 = vsel %vm868, %v856, %v869
    %vm871 = vcmp.eq.s32.totalorder %v866, 2
    %v872 = vxor.u32 %v856, 2147483648
    %v873 = vsel %vm871, %v872, %v864
    %v874 = vsel %vm867, %v870, %v873
    %v875 = vsel %vm865, nan, %v874
    %v876 = vmul.f32 %v252, %v413
    %v877 = vmul.f32 %v253, %v567
    %v878 = vmul.f32 %v254, %v721
    %v879 = vmul.f32 %v255, %v875
    %v880 = vand.u32 2147483647, %v256
    %vm881 = vcmp.le.f32.partialorder %v880, 0.7853982
    %vm882 = vcmp.lt.s32.totalorder %v256, 0
    %v883 = vand.u32 %v256, 2139095040
    %v884 = vshrl.u32 %v883, 23
    %v885 = vsub.s32 %v884, 127
    %v886 = vand.u32 2147483647, %v256
    %v887 = vand.u32 %v886, 8388607
    %v888 = vor.u32 %v887, 8388608
    %v889 = vsub.s32 0, %v888
    %v890 = vadd.s32 %v885, 1
    %vm891 = vcmp.gt.s32.totalorder %v890, 0
    %v892 = vsel %vm891, %v890, 0
    %v893 = vshrl.u32 %v892, 5
    %v894 = vand.u32 %v892, 31
    %v895 = vsub.s32 32, %v894
    %v896 = vshrl.u32 683565275, %v895
    %v897 = vshll.u32 683565275, %v894
    %v898 = vshrl.u32 2475754826, %v895
    %v899 = vor.u32 %v897, %v898
    %v900 = vshll.u32 2475754826, %v894
    %v901 = vshrl.u32 2131351028, %v895
    %v902 = vor.u32 %v900, %v901
    %v903 = vshll.u32 2131351028, %v894
    %v904 = vshrl.u32 2102212464, %v895
    %v905 = vor.u32 %v903, %v904
    %v906 = vshll.u32 2102212464, %v894
    %v907 = vshrl.u32 920167782, %v895
    %v908 = vor.u32 %v906, %v907
    %v909 = vshll.u32 920167782, %v894
    %v910 = vshrl.u32 1326507024, %v895
    %v911 = vor.u32 %v909, %v910
    %vm912 = vcmp.lt.s32.totalorder %v893, 1
    %vm913 = vcmp.lt.s32.totalorder %v893, 2
    %vm914 = vcmp.lt.s32.totalorder %v893, 3
    %vm915 = vcmp.lt.s32.totalorder %v893, 4
    %v916 = vsel %vm912, %v896, %v899
    %v917 = vsel %vm915, %v905, 2102212464
    %v918 = vsel %vm914, %v902, %v917
    %v919 = vsel %vm913, %v916, %v918
    %v920 = vsel %vm912, %v899, %v902
    %v921 = vsel %vm915, %v908, 920167782
    %v922 = vsel %vm914, %v905, %v921
    %v923 = vsel %vm913, %v920, %v922
    %v924 = vsel %vm912, %v902, %v905
    %v925 = vsel %vm915, %v911, 1326507024
    %v926 = vsel %vm914, %v908, %v925
    %v927 = vsel %vm913, %v924, %v926
    %v928 = vshll.u32 %v888, 8
    %v929 = vand.u32 %v928, 65535
    %v930 = vshrl.u32 %v928, 16
    %v931 = vand.u32 %v927, 65535
    %v932 = vshrl.u32 %v927, 16
    %v933 = vmul.u32 %v929, %v931
    %v934 = vmul.u32 %v929, %v932
    %v935 = vmul.u32 %v930, %v931
    %v936 = vmul.u32 %v930, %v932
    %v937 = vshll.u32 %v934, 16
    %v938 = vshrl.u32 %v934, 16
    %v939 = vshll.u32 %v935, 16
    %v940 = vshrl.u32 %v935, 16
    %vm941 = vc.u32 %v933, %v937
    %v942 = vsel %vm941, 1, 0
    %v943 = vadd.s32 %v933, %v937
    %v944 = vadd.s32 %v936, %v942
    %vm945 = vc.u32 %v943, %v939
    %v946 = vsel %vm945, 1, 0
    %v947 = vadd.s32 %v943, %v939
    %v948 = vadd.s32 %v944, %v946
    %v949 = vadd.s32 %v948, %v938
    %v950 = vadd.s32 %v949, %v940
    %v951 = vand.u32 %v928, 65535
    %v952 = vshrl.u32 %v928, 16
    %v953 = vand.u32 %v923, 65535
    %v954 = vshrl.u32 %v923, 16
    %v955 = vmul.u32 %v951, %v953
    %v956 = vmul.u32 %v951, %v954
    %v957 = vmul.u32 %v952, %v953
    %v958 = vmul.u32 %v952, %v954
    %v959 = vshll.u32 %v956, 16
    %v960 = vshrl.u32 %v956, 16
    %v961 = vshll.u32 %v957, 16
    %v962 = vshrl.u32 %v957, 16
    %vm963 = vc.u32 %v955, %v959
    %v964 = vsel %vm963, 1, 0
    %v965 = vadd.s32 %v955, %v959
    %v966 = vadd.s32 %v958, %v964
    %vm967 = vc.u32 %v965, %v961
    %v968 = vsel %vm967, 1, 0
    %v969 = vadd.s32 %v965, %v961
    %v970 = vadd.s32 %v966, %v968
    %v971 = vadd.s32 %v970, %v960
    %v972 = vadd.s32 %v971, %v962
    %v973 = vmul.u32 %v928, %v919
    %v974 = vadd.s32 %v950, %v969
    %vm975 = vc.u32 %v950, %v969
    %v976 = vadd.s32 %v972, 1
    %v977 = vsel %vm975, %v976, %v972
    %v978 = vadd.s32 %v973, %v977
    %v979 = vadd.s32 %v978, 536870912
    %v980 = vshrl.u32 %v979, 30
    %v981 = vshll.u32 %v980, 30
    %v982 = vsub.s32 %v978, %v981
    %vm983 = vcmp.lt.s32.totalorder %v982, 0
    %v984 = vsub.s32 0, %v982
    %v985 = vsel %vm983, %v984, %v982
    %v986 = vclz %v985
    %v987 = vsub.s32 %v986, 2
    %vm988 = vcmp.gt.s32.totalorder 0, %v987
    %v989 = vsel %vm988, 0, %v987
    %v990 = vsub.s32 32, %v989
    %v991 = vshll.u32 %v982, %v989
    %v992 = vshrl.u32 %v974, %v990
    %v993 = vor.u32 %v991, %v992
    %v994 = vsub.s32 4294967266, %v989
    %v995 = vadd.s32 %v994, 127
    %v996 = vshll.u32 %v995, 23
    %v997 = vor.u32 4788187, %v996
    %v998 = vand.u32 2147483647, %v997
    %v1000 = vcvt.s32.f32 %v993
    %v1001 = vmul.f32 %v1000, %v998
    %v1002 = vxor.u32 %v1001, 2147483648
    %v1003 = vsel %vm882, %v1002, %v1001
    %v1004 = vsub.s32 4, %v980
    %v1005 = vsel %vm882, %v1004, %v980
    %v1006 = vsel %vm881, %v256, %v1003
    %v1007 = vsel %vm881, 0, %v1005
    %v1008 = vmul.f32 %v1006, %v1006
    %v1009 = vmul.f32 %v1008, -0.001358992
    %v1010 = vadd.f32 %v1009, 0.041655596
    %v1011 = vmul.f32 %v1008, %v1010
    %v1012 = vadd.f32 %v1011, -0.4999988
    %v1013 = vmul.f32 %v1008, %v1012
    %v1014 = vadd.f32 1.0, %v1013
    %v1015 = vmul.f32 %v1006, %v1006
    %v1016 = vmul.f32 %v1015, -0.00019511016
    %v1017 = vadd.f32 %v1016, 0.008332121
    %v1018 = vmul.f32 %v1015, %v1017
    %v1019 = vadd.f32 %v1018, -0.16666654
    %v1020 = vmul.f32 %v1015, %v1019
    %v1021 = vadd.f32 %v1020, 1.0
    %v1022 = vmul.f32 %v1021, %v1006
    %vm1023 = vweird.f32 %v256
    %v1024 = vadd.s32 %v1007, 3
    %v1025 = vand.u32 %v1024, 3
    %vm1026 = vcmp.lt.s32.totalorder %v1025, 2
    %vm1027 = vcmp.eq.s32.totalorder %v1025, 0
    %v1028 = vxor.u32 %v1022, 2147483648
    %v1029 = vsel %vm1027, %v1014, %v1028
    %vm1030 = vcmp.eq.s32.totalorder %v1025, 2
    %v1031 = vxor.u32 %v1014, 2147483648
    %v1032 = vsel %vm1030, %v1031, %v1022
    %v1033 = vsel %vm1026, %v1029, %v1032
    %v1034 = vsel %vm1023, nan, %v1033
    %v1035 = vand.u32 2147483647, %v257
    %vm1036 = vcmp.le.f32.partialorder %v1035, 0.7853982
    %vm1037 = vcmp.lt.s32.totalorder %v257, 0
    %v1038 = vand.u32 %v257, 2139095040
    %v1039 = vshrl.u32 %v1038, 23
    %v1040 = vsub.s32 %v1039, 127
    %v1041 = vand.u32 2147483647, %v257
    %v1042 = vand.u32 %v1041, 8388607
    %v1043 = vor.u32 %v1042, 8388608
    %v1044 = vsub.s32 0, %v1043
    %v1045 = vadd.s32 %v1040, 1
    %vm1046 = vcmp.gt.s32.totalorder %v1045, 0
    %v1047 = vsel %vm1046, %v1045, 0
    %v1048 = vshrl.u32 %v1047, 5
    %v1049 = vand.u32 %v1047, 31
    %v1050 = vsub.s32 32, %v1049
    %v1051 = vshrl.u32 683565275, %v1050
    %v1052 = vshll.u32 683565275, %v1049
    %v1053 = vshrl.u32 2475754826, %v1050
    %v1054 = vor.u32 %v1052, %v1053
    %v1055 = vshll.u32 2475754826, %v1049
    %v1056 = vshrl.u32 2131351028, %v1050
    %v1057 = vor.u32 %v1055, %v1056
    %v1058 = vshll.u32 2131351028, %v1049
    %v1059 = vshrl.u32 2102212464, %v1050
    %v1060 = vor.u32 %v1058, %v1059
    %v1061 = vshll.u32 2102212464, %v1049
    %v1062 = vshrl.u32 920167782, %v1050
    %v1063 = vor.u32 %v1061, %v1062
    %v1064 = vshll.u32 920167782, %v1049
    %v1065 = vshrl.u32 1326507024, %v1050
    %v1066 = vor.u32 %v1064, %v1065
    %vm1067 = vcmp.lt.s32.totalorder %v1048, 1
    %vm1068 = vcmp.lt.s32.totalorder %v1048, 2
    %vm1069 = vcmp.lt.s32.totalorder %v1048, 3
    %vm1070 = vcmp.lt.s32.totalorder %v1048, 4
    %v1071 = vsel %vm1067, %v1051, %v1054
    %v1072 = vsel %vm1070, %v1060, 2102212464
    %v1073 = vsel %vm1069, %v1057, %v1072
    %v1074 = vsel %vm1068, %v1071, %v1073
    %v1075 = vsel %vm1067, %v1054, %v1057
    %v1076 = vsel %vm1070, %v1063, 920167782
    %v1077 = vsel %vm1069, %v1060, %v1076
    %v1078 = vsel %vm1068, %v1075, %v1077
    %v1079 = vsel %vm1067, %v1057, %v1060
    %v1080 = vsel %vm1070, %v1066, 1326507024
    %v1081 = vsel %vm1069, %v1063, %v1080
    %v1082 = vsel %vm1068, %v1079, %v1081
    %v1083 = vshll.u32 %v1043, 8
    %v1084 = vand.u32 %v1083, 65535
    %v1085 = vshrl.u32 %v1083, 16
    %v1086 = vand.u32 %v1082, 65535
    %v1087 = vshrl.u32 %v1082, 16
    %v1088 = vmul.u32 %v1084, %v1086
    %v1089 = vmul.u32 %v1084, %v1087
    %v1090 = vmul.u32 %v1085, %v1086
    %v1091 = vmul.u32 %v1085, %v1087
    %v1092 = vshll.u32 %v1089, 16
    %v1093 = vshrl.u32 %v1089, 16
    %v1094 = vshll.u32 %v1090, 16
    %v1095 = vshrl.u32 %v1090, 16
    %vm1096 = vc.u32 %v1088, %v1092
    %v1097 = vsel %vm1096, 1, 0
    %v1098 = vadd.s32 %v1088, %v1092
    %v1099 = vadd.s32 %v1091, %v1097
    %vm1100 = vc.u32 %v1098, %v1094
    %v1101 = vsel %vm1100, 1, 0
    %v1102 = vadd.s32 %v1098, %v1094
    %v1103 = vadd.s32 %v1099, %v1101
    %v1104 = vadd.s32 %v1103, %v1093
    %v1105 = vadd.s32 %v1104, %v1095
    %v1106 = vand.u32 %v1083, 65535
    %v1107 = vshrl.u32 %v1083, 16
    %v1108 = vand.u32 %v1078, 65535
    %v1109 = vshrl.u32 %v1078, 16
    %v1110 = vmul.u32 %v1106, %v1108
    %v1111 = vmul.u32 %v1106, %v1109
    %v1112 = vmul.u32 %v1107, %v1108
    %v1113 = vmul.u32 %v1107, %v1109
    %v1114 = vshll.u32 %v1111, 16
    %v1115 = vshrl.u32 %v1111, 16
    %v1116 = vshll.u32 %v1112, 16
    %v1117 = vshrl.u32 %v1112, 16
    %vm1118 = vc.u32 %v1110, %v1114
    %v1119 = vsel %vm1118, 1, 0
    %v1120 = vadd.s32 %v1110, %v1114
    %v1121 = vadd.s32 %v1113, %v1119
    %vm1122 = vc.u32 %v1120, %v1116
    %v1123 = vsel %vm1122, 1, 0
    %v1124 = vadd.s32 %v1120, %v1116
    %v1125 = vadd.s32 %v1121, %v1123
    %v1126 = vadd.s32 %v1125, %v1115
    %v1127 = vadd.s32 %v1126, %v1117
    %v1128 = vmul.u32 %v1083, %v1074
    %v1129 = vadd.s32 %v1105, %v1124
    %vm1130 = vc.u32 %v1105, %v1124
    %v1131 = vadd.s32 %v1127, 1
    %v1132 = vsel %vm1130, %v1131, %v1127
    %v1133 = vadd.s32 %v1128, %v1132
    %v1134 = vadd.s32 %v1133, 536870912
    %v1135 = vshrl.u32 %v1134, 30
    %v1136 = vshll.u32 %v1135, 30
    %v1137 = vsub.s32 %v1133, %v1136
    %vm1138 = vcmp.lt.s32.totalorder %v1137, 0
    %v1139 = vsub.s32 0, %v1137
    %v1140 = vsel %vm1138, %v1139, %v1137
    %v1141 = vclz %v1140
    %v1142 = vsub.s32 %v1141, 2
    %vm1143 = vcmp.gt.s32.totalorder 0, %v1142
    %v1144 = vsel %vm1143, 0, %v1142
    %v1145 = vsub.s32 32, %v1144
    %v1146 = vshll.u32 %v1137, %v1144
    %v1147 = vshrl.u32 %v1129, %v1145
    %v1148 = vor.u32 %v1146, %v1147
    %v1149 = vsub.s32 4294967266, %v1144
    %v1150 = vadd.s32 %v1149, 127
    %v1151 = vshll.u32 %v1150, 23
    %v1152 = vor.u32 4788187, %v1151
    %v1153 = vand.u32 2147483647, %v1152
    %v1155 = vcvt.s32.f32 %v1148
    %v1156 = vmul.f32 %v1155, %v1153
    %v1157 = vxor.u32 %v1156, 2147483648
    %v1158 = vsel %vm1037, %v1157, %v1156
    %v1159 = vsub.s32 4, %v1135
    %v1160 = vsel %vm1037, %v1159, %v1135
    %v1161 = vsel %vm1036, %v257, %v1158
    %v1162 = vsel %vm1036, 0, %v1160
    %v1163 = vmul.f32 %v1161, %v1161
    %v1164 = vmul.f32 %v1163, -0.001358992
    %v1165 = vadd.f32 %v1164, 0.041655596
    %v1166 = vmul.f32 %v1163, %v1165
    %v1167 = vadd.f32 %v1166, -0.4999988
    %v1168 = vmul.f32 %v1163, %v1167
    %v1169 = vadd.f32 1.0, %v1168
    %v1170 = vmul.f32 %v1161, %v1161
    %v1171 = vmul.f32 %v1170, -0.00019511016
    %v1172 = vadd.f32 %v1171, 0.008332121
    %v1173 = vmul.f32 %v1170, %v1172
    %v1174 = vadd.f32 %v1173, -0.16666654
    %v1175 = vmul.f32 %v1170, %v1174
    %v1176 = vadd.f32 %v1175, 1.0
    %v1177 = vmul.f32 %v1176, %v1161
    %vm1178 = vweird.f32 %v257
    %v1179 = vadd.s32 %v1162, 3
    %v1180 = vand.u32 %v1179, 3
    %vm1181 = vcmp.lt.s32.totalorder %v1180, 2
    %vm1182 = vcmp.eq.s32.totalorder %v1180, 0
    %v1183 = vxor.u32 %v1177, 2147483648
    %v1184 = vsel %vm1182, %v1169, %v1183
    %vm1185 = vcmp.eq.s32.totalorder %v1180, 2
    %v1186 = vxor.u32 %v1169, 2147483648
    %v1187 = vsel %vm1185, %v1186, %v1177
    %v1188 = vsel %vm1181, %v1184, %v1187
    %v1189 = vsel %vm1178, nan, %v1188
    %v1190 = vand.u32 2147483647, %v258
    %vm1191 = vcmp.le.f32.partialorder %v1190, 0.7853982
    %vm1192 = vcmp.lt.s32.totalorder %v258, 0
    %v1193 = vand.u32 %v258, 2139095040
    %v1194 = vshrl.u32 %v1193, 23
    %v1195 = vsub.s32 %v1194, 127
    %v1196 = vand.u32 2147483647, %v258
    %v1197 = vand.u32 %v1196, 8388607
    %v1198 = vor.u32 %v1197, 8388608
    %v1199 = vsub.s32 0, %v1198
    %v1200 = vadd.s32 %v1195, 1
    %vm1201 = vcmp.gt.s32.totalorder %v1200, 0
    %v1202 = vsel %vm1201, %v1200, 0
    %v1203 = vshrl.u32 %v1202, 5
    %v1204 = vand.u32 %v1202, 31
    %v1205 = vsub.s32 32, %v1204
    %v1206 = vshrl.u32 683565275, %v1205
    %v1207 = vshll.u32 683565275, %v1204
    %v1208 = vshrl.u32 2475754826, %v1205
    %v1209 = vor.u32 %v1207, %v1208
    %v1210 = vshll.u32 2475754826, %v1204
    %v1211 = vshrl.u32 2131351028, %v1205
    %v1212 = vor.u32 %v1210, %v1211
    %v1213 = vshll.u32 2131351028, %v1204
    %v1214 = vshrl.u32 2102212464, %v1205
    %v1215 = vor.u32 %v1213, %v1214
    %v1216 = vshll.u32 2102212464, %v1204
    %v1217 = vshrl.u32 920167782, %v1205
    %v1218 = vor.u32 %v1216, %v1217
    %v1219 = vshll.u32 920167782, %v1204
    %v1220 = vshrl.u32 1326507024, %v1205
    %v1221 = vor.u32 %v1219, %v1220
    %vm1222 = vcmp.lt.s32.totalorder %v1203, 1
    %vm1223 = vcmp.lt.s32.totalorder %v1203, 2
    %vm1224 = vcmp.lt.s32.totalorder %v1203, 3
    %vm1225 = vcmp.lt.s32.totalorder %v1203, 4
    %v1226 = vsel %vm1222, %v1206, %v1209
    %v1227 = vsel %vm1225, %v1215, 2102212464
    %v1228 = vsel %vm1224, %v1212, %v1227
    %v1229 = vsel %vm1223, %v1226, %v1228
    %v1230 = vsel %vm1222, %v1209, %v1212
    %v1231 = vsel %vm1225, %v1218, 920167782
    %v1232 = vsel %vm1224, %v1215, %v1231
    %v1233 = vsel %vm1223, %v1230, %v1232
    %v1234 = vsel %vm1222, %v1212, %v1215
    %v1235 = vsel %vm1225, %v1221, 1326507024
    %v1236 = vsel %vm1224, %v1218, %v1235
    %v1237 = vsel %vm1223, %v1234, %v1236
    %v1238 = vshll.u32 %v1198, 8
    %v1239 = vand.u32 %v1238, 65535
    %v1240 = vshrl.u32 %v1238, 16
    %v1241 = vand.u32 %v1237, 65535
    %v1242 = vshrl.u32 %v1237, 16
    %v1243 = vmul.u32 %v1239, %v1241
    %v1244 = vmul.u32 %v1239, %v1242
    %v1245 = vmul.u32 %v1240, %v1241
    %v1246 = vmul.u32 %v1240, %v1242
    %v1247 = vshll.u32 %v1244, 16
    %v1248 = vshrl.u32 %v1244, 16
    %v1249 = vshll.u32 %v1245, 16
    %v1250 = vshrl.u32 %v1245, 16
    %vm1251 = vc.u32 %v1243, %v1247
    %v1252 = vsel %vm1251, 1, 0
    %v1253 = vadd.s32 %v1243, %v1247
    %v1254 = vadd.s32 %v1246, %v1252
    %vm1255 = vc.u32 %v1253, %v1249
    %v1256 = vsel %vm1255, 1, 0
    %v1257 = vadd.s32 %v1253, %v1249
    %v1258 = vadd.s32 %v1254, %v1256
    %v1259 = vadd.s32 %v1258, %v1248
    %v1260 = vadd.s32 %v1259, %v1250
    %v1261 = vand.u32 %v1238, 65535
    %v1262 = vshrl.u32 %v1238, 16
    %v1263 = vand.u32 %v1233, 65535
    %v1264 = vshrl.u32 %v1233, 16
    %v1265 = vmul.u32 %v1261, %v1263
    %v1266 = vmul.u32 %v1261, %v1264
    %v1267 = vmul.u32 %v1262, %v1263
    %v1268 = vmul.u32 %v1262, %v1264
    %v1269 = vshll.u32 %v1266, 16
    %v1270 = vshrl.u32 %v1266, 16
    %v1271 = vshll.u32 %v1267, 16
    %v1272 = vshrl.u32 %v1267, 16
    %vm1273 = vc.u32 %v1265, %v1269
    %v1274 = vsel %vm1273, 1, 0
    %v1275 = vadd.s32 %v1265, %v1269
    %v1276 = vadd.s32 %v1268, %v1274
    %vm1277 = vc.u32 %v1275, %v1271
    %v1278 = vsel %vm1277, 1, 0
    %v1279 = vadd.s32 %v1275, %v1271
    %v1280 = vadd.s32 %v1276, %v1278
    %v1281 = vadd.s32 %v1280, %v1270
    %v1282 = vadd.s32 %v1281, %v1272
    %v1283 = vmul.u32 %v1238, %v1229
    %v1284 = vadd.s32 %v1260, %v1279
    %vm1285 = vc.u32 %v1260, %v1279
    %v1286 = vadd.s32 %v1282, 1
    %v1287 = vsel %vm1285, %v1286, %v1282
    %v1288 = vadd.s32 %v1283, %v1287
    %v1289 = vadd.s32 %v1288, 536870912
    %v1290 = vshrl.u32 %v1289, 30
    %v1291 = vshll.u32 %v1290, 30
    %v1292 = vsub.s32 %v1288, %v1291
    %vm1293 = vcmp.lt.s32.totalorder %v1292, 0
    %v1294 = vsub.s32 0, %v1292
    %v1295 = vsel %vm1293, %v1294, %v1292
    %v1296 = vclz %v1295
    %v1297 = vsub.s32 %v1296, 2
    %vm1298 = vcmp.gt.s32.totalorder 0, %v1297
    %v1299 = vsel %vm1298, 0, %v1297
    %v1300 = vsub.s32 32, %v1299
    %v1301 = vshll.u32 %v1292, %v1299
    %v1302 = vshrl.u32 %v1284, %v1300
    %v1303 = vor.u32 %v1301, %v1302
    %v1304 = vsub.s32 4294967266, %v1299
    %v1305 = vadd.s32 %v1304, 127
    %v1306 = vshll.u32 %v1305, 23
    %v1307 = vor.u32 4788187, %v1306
    %v1308 = vand.u32 2147483647, %v1307
    %v1310 = vcvt.s32.f32 %v1303
    %v1311 = vmul.f32 %v1310, %v1308
    %v1312 = vxor.u32 %v1311, 2147483648
    %v1313 = vsel %vm1192, %v1312, %v1311
    %v1314 = vsub.s32 4, %v1290
    %v1315 = vsel %vm1192, %v1314, %v1290
    %v1316 = vsel %vm1191, %v258, %v1313
    %v1317 = vsel %vm1191, 0, %v1315
    %v1318 = vmul.f32 %v1316, %v1316
    %v1319 = vmul.f32 %v1318, -0.001358992
    %v1320 = vadd.f32 %v1319, 0.041655596
    %v1321 = vmul.f32 %v1318, %v1320
    %v1322 = vadd.f32 %v1321, -0.4999988
    %v1323 = vmul.f32 %v1318, %v1322
    %v1324 = vadd.f32 1.0, %v1323
    %v1325 = vmul.f32 %v1316, %v1316
    %v1326 = vmul.f32 %v1325, -0.00019511016
    %v1327 = vadd.f32 %v1326, 0.008332121
    %v1328 = vmul.f32 %v1325, %v1327
    %v1329 = vadd.f32 %v1328, -0.16666654
    %v1330 = vmul.f32 %v1325, %v1329
    %v1331 = vadd.f32 %v1330, 1.0
    %v1332 = vmul.f32 %v1331, %v1316
    %vm1333 = vweird.f32 %v258
    %v1334 = vadd.s32 %v1317, 3
    %v1335 = vand.u32 %v1334, 3
    %vm1336 = vcmp.lt.s32.totalorder %v1335, 2
    %vm1337 = vcmp.eq.s32.totalorder %v1335, 0
    %v1338 = vxor.u32 %v1332, 2147483648
    %v1339 = vsel %vm1337, %v1324, %v1338
    %vm1340 = vcmp.eq.s32.totalorder %v1335, 2
    %v1341 = vxor.u32 %v1324, 2147483648
    %v1342 = vsel %vm1340, %v1341, %v1332
    %v1343 = vsel %vm1336, %v1339, %v1342
    %v1344 = vsel %vm1333, nan, %v1343
    %v1345 = vand.u32 2147483647, %v259
    %vm1346 = vcmp.le.f32.partialorder %v1345, 0.7853982
    %vm1347 = vcmp.lt.s32.totalorder %v259, 0
    %v1348 = vand.u32 %v259, 2139095040
    %v1349 = vshrl.u32 %v1348, 23
    %v1350 = vsub.s32 %v1349, 127
    %v1351 = vand.u32 2147483647, %v259
    %v1352 = vand.u32 %v1351, 8388607
    %v1353 = vor.u32 %v1352, 8388608
    %v1354 = vsub.s32 0, %v1353
    %v1355 = vadd.s32 %v1350, 1
    %vm1356 = vcmp.gt.s32.totalorder %v1355, 0
    %v1357 = vsel %vm1356, %v1355, 0
    %v1358 = vshrl.u32 %v1357, 5
    %v1359 = vand.u32 %v1357, 31
    %v1360 = vsub.s32 32, %v1359
    %v1361 = vshrl.u32 683565275, %v1360
    %v1362 = vshll.u32 683565275, %v1359
    %v1363 = vshrl.u32 2475754826, %v1360
    %v1364 = vor.u32 %v1362, %v1363
    %v1365 = vshll.u32 2475754826, %v1359
    %v1366 = vshrl.u32 2131351028, %v1360
    %v1367 = vor.u32 %v1365, %v1366
    %v1368 = vshll.u32 2131351028, %v1359
    %v1369 = vshrl.u32 2102212464, %v1360
    %v1370 = vor.u32 %v1368, %v1369
    %v1371 = vshll.u32 2102212464, %v1359
    %v1372 = vshrl.u32 920167782, %v1360
    %v1373 = vor.u32 %v1371, %v1372
    %v1374 = vshll.u32 920167782, %v1359
    %v1375 = vshrl.u32 1326507024, %v1360
    %v1376 = vor.u32 %v1374, %v1375
    %vm1377 = vcmp.lt.s32.totalorder %v1358, 1
    %vm1378 = vcmp.lt.s32.totalorder %v1358, 2
    %vm1379 = vcmp.lt.s32.totalorder %v1358, 3
    %vm1380 = vcmp.lt.s32.totalorder %v1358, 4
    %v1381 = vsel %vm1377, %v1361, %v1364
    %v1382 = vsel %vm1380, %v1370, 2102212464
    %v1383 = vsel %vm1379, %v1367, %v1382
    %v1384 = vsel %vm1378, %v1381, %v1383
    %v1385 = vsel %vm1377, %v1364, %v1367
    %v1386 = vsel %vm1380, %v1373, 920167782
    %v1387 = vsel %vm1379, %v1370, %v1386
    %v1388 = vsel %vm1378, %v1385, %v1387
    %v1389 = vsel %vm1377, %v1367, %v1370
    %v1390 = vsel %vm1380, %v1376, 1326507024
    %v1391 = vsel %vm1379, %v1373, %v1390
    %v1392 = vsel %vm1378, %v1389, %v1391
    %v1393 = vshll.u32 %v1353, 8
    %v1394 = vand.u32 %v1393, 65535
    %v1395 = vshrl.u32 %v1393, 16
    %v1396 = vand.u32 %v1392, 65535
    %v1397 = vshrl.u32 %v1392, 16
    %v1398 = vmul.u32 %v1394, %v1396
    %v1399 = vmul.u32 %v1394, %v1397
    %v1400 = vmul.u32 %v1395, %v1396
    %v1401 = vmul.u32 %v1395, %v1397
    %v1402 = vshll.u32 %v1399, 16
    %v1403 = vshrl.u32 %v1399, 16
    %v1404 = vshll.u32 %v1400, 16
    %v1405 = vshrl.u32 %v1400, 16
    %vm1406 = vc.u32 %v1398, %v1402
    %v1407 = vsel %vm1406, 1, 0
    %v1408 = vadd.s32 %v1398, %v1402
    %v1409 = vadd.s32 %v1401, %v1407
    %vm1410 = vc.u32 %v1408, %v1404
    %v1411 = vsel %vm1410, 1, 0
    %v1412 = vadd.s32 %v1408, %v1404
    %v1413 = vadd.s32 %v1409, %v1411
    %v1414 = vadd.s32 %v1413, %v1403
    %v1415 = vadd.s32 %v1414, %v1405
    %v1416 = vand.u32 %v1393, 65535
    %v1417 = vshrl.u32 %v1393, 16
    %v1418 = vand.u32 %v1388, 65535
    %v1419 = vshrl.u32 %v1388, 16
    %v1420 = vmul.u32 %v1416, %v1418
    %v1421 = vmul.u32 %v1416, %v1419
    %v1422 = vmul.u32 %v1417, %v1418
    %v1423 = vmul.u32 %v1417, %v1419
    %v1424 = vshll.u32 %v1421, 16
    %v1425 = vshrl.u32 %v1421, 16
    %v1426 = vshll.u32 %v1422, 16
    %v1427 = vshrl.u32 %v1422, 16
    %vm1428 = vc.u32 %v1420, %v1424
    %v1429 = vsel %vm1428, 1, 0
    %v1430 = vadd.s32 %v1420, %v1424
    %v1431 = vadd.s32 %v1423, %v1429
    %vm1432 = vc.u32 %v1430, %v1426
    %v1433 = vsel %vm1432, 1, 0
    %v1434 = vadd.s32 %v1430, %v1426
    %v1435 = vadd.s32 %v1431, %v1433
    %v1436 = vadd.s32 %v1435, %v1425
    %v1437 = vadd.s32 %v1436, %v1427
    %v1438 = vmul.u32 %v1393, %v1384
    %v1439 = vadd.s32 %v1415, %v1434
    %vm1440 = vc.u32 %v1415, %v1434
    %v1441 = vadd.s32 %v1437, 1
    %v1442 = vsel %vm1440, %v1441, %v1437
    %v1443 = vadd.s32 %v1438, %v1442
    %v1444 = vadd.s32 %v1443, 536870912
    %v1445 = vshrl.u32 %v1444, 30
    %v1446 = vshll.u32 %v1445, 30
    %v1447 = vsub.s32 %v1443, %v1446
    %vm1448 = vcmp.lt.s32.totalorder %v1447, 0
    %v1449 = vsub.s32 0, %v1447
    %v1450 = vsel %vm1448, %v1449, %v1447
    %v1451 = vclz %v1450
    %v1452 = vsub.s32 %v1451, 2
    %vm1453 = vcmp.gt.s32.totalorder 0, %v1452
    %v1454 = vsel %vm1453, 0, %v1452
    %v1455 = vsub.s32 32, %v1454
    %v1456 = vshll.u32 %v1447, %v1454
    %v1457 = vshrl.u32 %v1439, %v1455
    %v1458 = vor.u32 %v1456, %v1457
    %v1459 = vsub.s32 4294967266, %v1454
    %v1460 = vadd.s32 %v1459, 127
    %v1461 = vshll.u32 %v1460, 23
    %v1462 = vor.u32 4788187, %v1461
    %v1463 = vand.u32 2147483647, %v1462
    %v1465 = vcvt.s32.f32 %v1458
    %v1466 = vmul.f32 %v1465, %v1463
    %v1467 = vxor.u32 %v1466, 2147483648
    %v1468 = vsel %vm1347, %v1467, %v1466
    %v1469 = vsub.s32 4, %v1445
    %v1470 = vsel %vm1347, %v1469, %v1445
    %v1471 = vsel %vm1346, %v259, %v1468
    %v1472 = vsel %vm1346, 0, %v1470
    %v1473 = vmul.f32 %v1471, %v1471
    %v1474 = vmul.f32 %v1473, -0.001358992
    %v1475 = vadd.f32 %v1474, 0.041655596
    %v1476 = vmul.f32 %v1473, %v1475
    %v1477 = vadd.f32 %v1476, -0.4999988
    %v1478 = vmul.f32 %v1473, %v1477
    %v1479 = vadd.f32 1.0, %v1478
    %v1480 = vmul.f32 %v1471, %v1471
    %v1481 = vmul.f32 %v1480, -0.00019511016
    %v1482 = vadd.f32 %v1481, 0.008332121
    %v1483 = vmul.f32 %v1480, %v1482
    %v1484 = vadd.f32 %v1483, -0.16666654
    %v1485 = vmul.f32 %v1480, %v1484
    %v1486 = vadd.f32 %v1485, 1.0
    %v1487 = vmul.f32 %v1486, %v1471
    %vm1488 = vweird.f32 %v259
    %v1489 = vadd.s32 %v1472, 3
    %v1490 = vand.u32 %v1489, 3
    %vm1491 = vcmp.lt.s32.totalorder %v1490, 2
    %vm1492 = vcmp.eq.s32.totalorder %v1490, 0
    %v1493 = vxor.u32 %v1487, 2147483648
    %v1494 = vsel %vm1492, %v1479, %v1493
    %vm1495 = vcmp.eq.s32.totalorder %v1490, 2
    %v1496 = vxor.u32 %v1479, 2147483648
    %v1497 = vsel %vm1495, %v1496, %v1487
    %v1498 = vsel %vm1491, %v1494, %v1497
    %v1499 = vsel %vm1488, nan, %v1498
    %v1500 = vmul.f32 %v252, %v1034
    %v1501 = vmul.f32 %v253, %v1189
    %v1502 = vmul.f32 %v254, %v1344
    %v1503 = vmul.f32 %v255, %v1499
    %v1504 = vld [vmem:[#allocation3] sm:$0xff]
    %v1505 = vld [vmem:[#allocation3 + $0x8] sm:$0xff]
    %v1510 = vrot.slane %v877, 6
    %v1511 = vrot.slane %v878, 4
    %v1512 = vrot.slane %v879, 2
    %vm1513 = vcmask 1041408
    %v1514 = vsel %vm1513, %v876, %v1510
    %vm1515 = vcmask 1045508
    %v1516 = vsel %vm1515, %v1511, %v1512
    %vm1517 = vcmask 1043456
    %v1518 = vsel %vm1517, %v1514, %v1516
    %v1520 = vadd.f32 %v1504, %v1518
    %1521 = vst [vmem:[#allocation6] sm:$0xff] %v1520
    %v1526 = vrot.slane %v1501, 6
    %v1527 = vrot.slane %v1502, 4
    %v1528 = vrot.slane %v1503, 2
    %v1529 = vsel %vm1513, %v1500, %v1526
    %v1530 = vsel %vm1515, %v1527, %v1528
    %v1531 = vsel %vm1517, %v1529, %v1530
    %v1533 = vadd.f32 %v1505, %v1531
    %1534 = vst [vmem:[#allocation6 + $0x8] sm:$0xff] %v1533
    // Predicated region
    $region14: #{tpu_custom_call.1} parent=1 // pred_check
      _
    $region15: #{tpu_custom_call.1} parent=1 // pred_check_branch
      %1536 = sbr.rel (0) target = $region17
    $region16: #{tpu_custom_call.1} parent=1 // pred_region
      %1538 = vsyncadd [#allocation5], 0
      %s1540 = sshll.u32 [#allocation6], 4
      %s1541 = int_to_ptr.vmem [resolvable:$true] %s1540
      %s1542 = sshll.u32 %s2, 4
      %s1543 = int_to_ptr.hbm [resolvable:$true] %s1542
      %1545 = dma.vmem_to_hbm [thread:$0]  %s1541, 256, %s1543, [#allocation5]
    $region17: #{tpu_custom_call.1} parent=1 // pred_fallthru
      _
    // Predicated region
    $region18: #{tpu_custom_call.1} parent=1 // pred_check
      _
    $region19: #{tpu_custom_call.1} parent=1 // pred_check_branch
      %1547 = sbr.rel (0) target = $region21
    $region20: #{tpu_custom_call.1} parent=1 // pred_region
      %1549 = dma.done [#allocation5], 256
    $region21: #{tpu_custom_call.1} parent=1 // pred_fallthru
      _
    %1550 = vsyncpa [#allocation4], 1
    %1551 = vsyncpa [#allocation5], 1

</llo_original>
